<compile_context>
chip_gen: v7x
topology: tpu7x:2x2x1
jax: 0.10.0
libtpu: 0.0.40
codegen_flags: <defaults>
</compile_context>

<pallas_src>
import jax
import jax.numpy as jnp
from jax.experimental import pallas as pl
from jax.experimental.pallas import tpu as pltpu

VX, VY, VZ = 0.2, 0.2, 4.0
PCR = (0.0, -40.0, -3.0, 70.4, 40.0, 1.0)
X_OFF = VX / 2.0 + PCR[0]
Y_OFF = VY / 2.0 + PCR[1]
Z_OFF = VZ / 2.0 + PCR[2]
C_IN = 4  # x, y, z, intensity


def hardvfe_kernel(feats_ref, meta_ref, w0_ref, w1_ref, out_ref):
    """One tile of `tile_m` voxels; the voxel axis is the lane axis of every tensor.

    feats_ref : (N*C_IN, tile_m) f32   point features, row = point*C_IN + channel
    meta_ref  : (4, tile_m)      f32   row 0 = num_points, rows 1:4 = voxel centers (x,y,z)
    w0_ref    : (F0, 12)         f32   [G | W_ctr | W_mu | a_int | w_d | b0]
    w1_ref    : (F1, 2*F0+1)     f32   [W1p | W1a | b1]
    out_ref   : (F1, tile_m)     f32   lane-dense output
    """
    F0 = w0_ref.shape[0]
    F1 = w1_ref.shape[0]
    tile_m = out_ref.shape[1]
    n_pts = feats_ref.shape[0] // C_IN
    # Lane sub-chunks keep the (r, agg0, kvox, broadcasts) live set well under 64 vregs
    # at any tile_m (spill fix from the review), while the grid step amortises DMA/setup.
    sub = 256 if tile_m % 256 == 0 else 128
    n_sub = tile_m // sub

    w0 = w0_ref[...]
    w1 = w1_ref[...]
    g_bf = w0[:, 0:3].astype(jnp.bfloat16)    # combined xyz weight (bf16 dot LHS)
    w_ctr = w0[:, 3:6]                        # per-voxel centers weight (f32 const path)
    w_mu = w0[:, 6:9]                         # per-voxel mean weight   (f32 const path)
    a_int = w0[:, 9:10]                       # intensity column
    w_d = w0[:, 10:11]                        # distance column
    b0 = w0[:, 11:12]
    w1p = w1[:, 0:F0]                         # layer-1 per-point half   (f32, see header)
    w1a = w1[:, F0:2 * F0]                    # layer-1 aggregate half
    b1 = w1[:, 2 * F0:2 * F0 + 1]

    # Hoisted loop-invariant broadcasts (review item 8).
    b0_b = jnp.broadcast_to(b0, (F0, sub))
    ai_b = jnp.broadcast_to(a_int, (F0, sub))
    wd_b = jnp.broadcast_to(w_d, (F0, sub))

    for s in range(n_sub):                    # static, unrolled
        ls = pl.ds(s * sub, sub)
        meta = meta_ref[:, ls]                # (4, sub)
        npts = meta[0:1, :]
        centers = meta[1:4, :]                # (3, sub) voxel centers, f32

        npts_c = jnp.maximum(npts, 1.0)       # empty (padded) voxels: no div-by-zero
        inv_n = pl.reciprocal(npts_c, approx=True)       # EUP reciprocal
        inv_n = inv_n * (2.0 - npts_c * inv_n)           # one Newton step -> f32 accuracy

        # Per-voxel mean of xyz over points.  Padded point rows are zero by the hard
        # voxelization contract; summing them unmasked matches the reference module.
        xyz_sum = feats_ref[pl.ds(0, 3), ls]
        for n in range(1, n_pts):
            xyz_sum = xyz_sum + feats_ref[pl.ds(n * C_IN, 3), ls]
        mean = xyz_sum * inv_n                # (3, sub)

        # Per-voxel constant of VFE layer 0: all world-coordinate-scale terms stay f32.
        kvox = (jnp.dot(w_ctr, centers, preferred_element_type=jnp.float32)
                - jnp.dot(w_mu, mean, preferred_element_type=jnp.float32))   # (F0, sub)

        r = None      # running max_n of  W1p @ p0_n
        agg0 = None   # running max_n of  p0_n
        for n in range(n_pts):                # N is small & static -> unrolled
            fn = feats_ref[pl.ds(n * C_IN, C_IN), ls]    # (C_IN, sub) raw point n
            xyz_n = fn[0:3, :]
            q_n = (xyz_n - centers).astype(jnp.bfloat16)  # centred coords: small magnitude
            dist_n = jnp.sqrt(jnp.sum(xyz_n * xyz_n, axis=0, keepdims=True))  # (1, sub)
            lin = (jnp.dot(g_bf, q_n, preferred_element_type=jnp.float32)
                   + ai_b * fn[3:4, :] + wd_b * dist_n)                       # (F0, sub)
            mask_n = (npts > float(n)).astype(jnp.float32)                    # padding mask
            # layer 0: Linear(BN-scale folded) -> +bias -> ReLU (mask commutes w/ matmul)
            p0 = jnp.maximum((lin + kvox) * mask_n + b0_b, 0.0)
            rn = jnp.dot(w1p, p0, preferred_element_type=jnp.float32)         # (F1, sub)
            agg0 = p0 if agg0 is None else jnp.maximum(agg0, p0)
            r = rn if r is None else jnp.maximum(r, rn)

        # layer 1 + final max over points, using max-before-ReLU:
        #   max_n ReLU(W1p@p0_n + W1a@agg0 + b1) = ReLU(max_n(W1p@p0_n) + W1a@agg0 + b1)
        out = jnp.maximum(
            r + jnp.dot(w1a, agg0, preferred_element_type=jnp.float32) + b1, 0.0)
        out_ref[:, ls] = out.astype(out_ref.dtype)        # lane-dense store


def hardvfe_forward(features, num_points, coors, params, *, tile_m=None):
    """features: (M,N,C) f32, num_points: (M,) int, coors: (M,4) int (batch, z, y, x)."""
    M, N, C = features.shape
    assert C == C_IN
    w0, s0, b0, w1, s1, b1 = params
    F0 = w0.shape[1]
    F1 = w1.shape[1]

    if tile_m is None:
        # Keep the grid >= ~8 steps (pipelining + dual-TC sharding on v7x) for small M,
        # grow the tile (up to 1024) only when M is large enough to amortise it.
        tile_m = min(1024, max(128, ((M // 8) // 256) * 256))
    assert tile_m % 128 == 0, "tile_m must be a multiple of the 128-lane width"

    # Fold eval-mode BN scale into the bias-free Linear weights, then pre-combine the
    # raw-xyz / cluster-offset / center-offset columns (one matmul per point in-kernel).
    w0s = (w0 * s0.reshape(1, F0)).astype(jnp.float32)      # (C+7, F0)
    w1s = (w1 * s1.reshape(1, F1)).astype(jnp.float32)      # (2*F0, F1)
    a_xyz = w0s[0:3].T                                      # (F0,3) raw xyz columns
    a_int = w0s[3:4].T                                      # (F0,1) intensity column
    b_cl = w0s[C:C + 3].T                                   # (F0,3) cluster-offset columns
    c_ce = w0s[C + 3:C + 6].T                               # (F0,3) center-offset columns
    w_d = w0s[C + 6:C + 7].T                                # (F0,1) distance column
    g = a_xyz + b_cl + c_ce                                 # combined per-point xyz weight
    w_ctr = a_xyz + b_cl                                    # per-voxel centers weight
    w0pack = jnp.concatenate(
        [g, w_ctr, b_cl, a_int, w_d, b0.reshape(F0, 1).astype(jnp.float32)],
        axis=1)                                             # (F0, 12)
    w1pack = jnp.concatenate(
        [w1s[0:F0].T, w1s[F0:2 * F0].T, b1.reshape(F1, 1).astype(jnp.float32)],
        axis=1)                                             # (F1, 2*F0+1)

    # Pad the ragged voxel count up to a tile multiple; padded voxels are trimmed below.
    m_pad = pl.cdiv(M, tile_m) * tile_m
    pad = m_pad - M

    # Layout plumbing (once, outside the kernel): voxel axis -> lane axis, dense rows.
    # TODO(synk): ideally the producer emits features voxel-last so this transpose (an
    # extra HBM pass) disappears; allow_input_fusion was intentionally not set.
    feats_t = jnp.transpose(features.astype(jnp.float32), (1, 2, 0)).reshape(N * C, M)
    feats_t = jnp.pad(feats_t, ((0, 0), (0, pad)))

    # Per-voxel meta in f32 with voxel centers precomputed from the tiny coors array.
    coors_f = coors.astype(jnp.float32)
    meta = jnp.stack([
        num_points.astype(jnp.float32),
        coors_f[:, 3] * VX + X_OFF,
        coors_f[:, 2] * VY + Y_OFF,
        coors_f[:, 1] * VZ + Z_OFF], axis=0)                # (4, M)
    meta = jnp.pad(meta, ((0, 0), (0, pad)))

    out_t = pl.pallas_call(
        hardvfe_kernel,
        out_shape=jax.ShapeDtypeStruct((F1, m_pad), jnp.float32),
        grid_spec=pltpu.PrefetchScalarGridSpec(
            num_scalar_prefetch=0,
            grid=(m_pad // tile_m,),
            in_specs=[
                pl.BlockSpec((N * C, tile_m), lambda i: (0, i)),     # point features
                pl.BlockSpec((4, tile_m), lambda i: (0, i)),         # packed per-voxel meta
                pl.BlockSpec((F0, 12), lambda i: (0, 0)),            # packed layer-0 consts
                pl.BlockSpec((F1, 2 * F0 + 1), lambda i: (0, 0)),    # packed layer-1 consts
            ],
            out_specs=pl.BlockSpec((F1, tile_m), lambda i: (0, i)),  # lane-dense output
        ),
        compiler_params=pltpu.CompilerParams(
            dimension_semantics=("parallel",),       # voxel tiles shard across TCs (v7x)
            vmem_limit_bytes=32 * 1024 * 1024),
    )(feats_t, meta, w0pack, w1pack)

    return out_t[:, :M].T                                    # (M, F1)


def hardvfe_ref(features, num_points, coors, params):
    """Pure-JAX reference mirroring the PyTorch HardVFE forward (eval-mode BN)."""
    w0, s0, b0, w1, s1, b1 = params
    f = features.astype(jnp.float32)
    M, N, _ = f.shape
    npts = num_points.astype(jnp.float32)[:, None, None]
    xyz = f[:, :, :3]
    points_mean = jnp.sum(xyz, axis=1, keepdims=True) / npts
    f_cluster = xyz - points_mean
    c = coors.astype(jnp.float32)
    f_center = jnp.stack([
        xyz[:, :, 0] - (c[:, 3:4] * VX + X_OFF),
        xyz[:, :, 1] - (c[:, 2:3] * VY + Y_OFF),
        xyz[:, :, 2] - (c[:, 1:2] * VZ + Z_OFF)], axis=-1)
    dist = jnp.sqrt(jnp.sum(xyz * xyz, axis=-1, keepdims=True))
    vf = jnp.concatenate([f, f_cluster, f_center, dist], axis=-1)
    mask = (jnp.arange(N)[None, :] < num_points[:, None]).astype(jnp.float32)
    vf = vf * mask[:, :, None]
    hp = jax.lax.Precision.HIGHEST
    p0 = jnp.maximum(jnp.einsum('mnc,cd->mnd', vf, w0, precision=hp) * s0 + b0, 0.0)
    agg0 = jnp.max(p0, axis=1, keepdims=True)
    cat0 = jnp.concatenate([p0, jnp.broadcast_to(agg0, p0.shape)], axis=-1)
    p1 = jnp.maximum(jnp.einsum('mnc,cd->mnd', cat0, w1, precision=hp) * s1 + b1, 0.0)
    return jnp.max(p1, axis=1)


if __name__ == "__main__":
    key = jax.random.PRNGKey(0)
    M, N = 1000, 8                     # ragged M exercises the pad/trim path; grid = 8
    FEAT0, FEAT1 = 16, 32              # feat_channels=[16, 32]
    C_AUG = C_IN + 3 + 3 + 1           # + cluster-center + voxel-center + distance = 11
    EPS = 1e-3

    keys = jax.random.split(key, 14)

    # --- inputs: hard-voxelized point cloud (points lie inside their voxel, padded
    #     point rows are exactly zero, per the mmdet3d hard-voxelization contract) ---
    num_points = jax.random.randint(keys[0], (M,), 1, N + 1).astype(jnp.int32)
    xi = jax.random.randint(keys[1], (M,), 0, 352)
    yi = jax.random.randint(keys[2], (M,), 0, 400)
    zi = jnp.zeros((M,), jnp.int32)
    bi = jax.random.randint(keys[3], (M,), 0, 2)
    coors = jnp.stack([bi, zi, yi, xi], axis=-1).astype(jnp.int32)   # (batch, z, y, x)

    centers = jnp.stack([
        xi.astype(jnp.float32) * VX + X_OFF,
        yi.astype(jnp.float32) * VY + Y_OFF,
        zi.astype(jnp.float32) * VZ + Z_OFF], axis=-1)               # (M, 3)
    jitter = jax.random.uniform(keys[4], (M, N, 3), minval=-0.5, maxval=0.5)
    xyz = centers[:, None, :] + jitter * jnp.array([VX, VY, 1.0], jnp.float32)
    intensity = jax.random.uniform(keys[5], (M, N, 1))
    features = jnp.concatenate([xyz, intensity], axis=-1).astype(jnp.float32)
    pad_mask = (jnp.arange(N)[None, :] < num_points[:, None]).astype(jnp.float32)
    features = features * pad_mask[:, :, None]                       # zero padded rows

    # --- deterministic parameters (Linear weights + BN1d folded to scale/bias) ---
    w0 = (0.1 * jax.random.normal(keys[6], (C_AUG, FEAT0))).astype(jnp.float32)
    w1 = (0.1 * jax.random.normal(keys[7], (2 * FEAT0, FEAT1))).astype(jnp.float32)

    g0 = 1.0 + 0.1 * jax.random.normal(keys[8], (FEAT0,))
    bt0 = 0.1 * jax.random.normal(keys[9], (FEAT0,))
    rm0 = 0.1 * jax.random.normal(keys[10], (FEAT0,))
    rv0 = jnp.ones((FEAT0,))
    s0 = (g0 / jnp.sqrt(rv0 + EPS)).reshape(1, FEAT0).astype(jnp.float32)
    b0 = (bt0 - rm0 * g0 / jnp.sqrt(rv0 + EPS)).reshape(1, FEAT0).astype(jnp.float32)

    g1 = 1.0 + 0.1 * jax.random.normal(keys[11], (FEAT1,))
    bt1 = 0.1 * jax.random.normal(keys[12], (FEAT1,))
    rm1 = 0.1 * jax.random.normal(keys[13], (FEAT1,))
    rv1 = jnp.ones((FEAT1,))
    s1 = (g1 / jnp.sqrt(rv1 + EPS)).reshape(1, FEAT1).astype(jnp.float32)
    b1 = (bt1 - rm1 * g1 / jnp.sqrt(rv1 + EPS)).reshape(1, FEAT1).astype(jnp.float32)

    params = (w0, s0, b0, w1, s1, b1)

    out = hardvfe_forward(features, num_points, coors, params)   # auto tile_m -> 128, grid 8
    out = jax.block_until_ready(out)
    assert out.shape == (M, FEAT1)

    ref = hardvfe_ref(features, num_points, coors, params)
    assert jnp.allclose(out, ref, rtol=1e-3, atol=1e-3), \
        float(jnp.max(jnp.abs(out - ref)))

    # TODO(synk): fusion_layer / DynamicScatter paths are unused when fusion_layer=None
    # (as configured here) and are not translated; bf16 staging of the raw features and
    # bf16 layer-1 matmul operands were skipped because raw world coordinates (|x|~70 m)
    # make their rounding exceed the rtol=1e-3 f32 check.
    print("KERNEL_OK")
</pallas_src>

<mosaic_0001>
module attributes {stable_mosaic.version = 11 : i64} {
  func.func @hardvfe_kernel(%arg0: i32, %arg1: memref<32x128xf32, #tpu.memory_space<vmem>>, %arg2: memref<4x128xf32, #tpu.memory_space<vmem>>, %arg3: memref<16x12xf32, #tpu.memory_space<vmem>>, %arg4: memref<32x33xf32, #tpu.memory_space<vmem>>, %arg5: memref<32x128xf32, #tpu.memory_space<vmem>>) attributes {dimension_semantics = [#tpu.dimension_semantics<parallel>], iteration_bounds = array<i64: 8>, scalar_prefetch = 0 : i64, scratch_operands = 0 : i64, tpu.core_type = #tpu.core_type<tc>, window_params = [{transform_indices = @transform_0, window_bounds = array<i64: 32, 128>}, {transform_indices = @transform_1, window_bounds = array<i64: 4, 128>}, {pipeline_mode = #tpu.pipeline_mode<synchronous>, transform_indices = @transform_2, window_bounds = array<i64: 16, 12>}, {pipeline_mode = #tpu.pipeline_mode<synchronous>, transform_indices = @transform_3, window_bounds = array<i64: 32, 33>}, {transform_indices = @transform_4, window_bounds = array<i64: 32, 128>}]} {
    %c0 = arith.constant 0 : index
    %c0_0 = arith.constant 0 : index
    %0 = vector.load %arg3[%c0, %c0_0] : memref<16x12xf32, #tpu.memory_space<vmem>>, vector<16x12xf32>
    %c0_1 = arith.constant 0 : index
    %c0_2 = arith.constant 0 : index
    %1 = vector.load %arg4[%c0_1, %c0_2] : memref<32x33xf32, #tpu.memory_space<vmem>>, vector<32x33xf32>
    %2 = vector.extract_strided_slice %0 {offsets = [0, 0], sizes = [16, 3], strides = [1, 1]} : vector<16x12xf32> to vector<16x3xf32>
    %3 = arith.truncf %2 : vector<16x3xf32> to vector<16x3xbf16>
    %4 = vector.extract_strided_slice %0 {offsets = [0, 3], sizes = [16, 3], strides = [1, 1]} : vector<16x12xf32> to vector<16x3xf32>
    %5 = vector.extract_strided_slice %0 {offsets = [0, 6], sizes = [16, 3], strides = [1, 1]} : vector<16x12xf32> to vector<16x3xf32>
    %6 = vector.extract_strided_slice %0 {offsets = [0, 9], sizes = [16, 1], strides = [1, 1]} : vector<16x12xf32> to vector<16x1xf32>
    %7 = vector.extract_strided_slice %0 {offsets = [0, 10], sizes = [16, 1], strides = [1, 1]} : vector<16x12xf32> to vector<16x1xf32>
    %8 = vector.extract_strided_slice %0 {offsets = [0, 11], sizes = [16, 1], strides = [1, 1]} : vector<16x12xf32> to vector<16x1xf32>
    %9 = vector.extract_strided_slice %1 {offsets = [0, 0], sizes = [32, 16], strides = [1, 1]} : vector<32x33xf32> to vector<32x16xf32>
    %10 = vector.extract_strided_slice %1 {offsets = [0, 16], sizes = [32, 16], strides = [1, 1]} : vector<32x33xf32> to vector<32x16xf32>
    %11 = vector.extract_strided_slice %1 {offsets = [0, 32], sizes = [32, 1], strides = [1, 1]} : vector<32x33xf32> to vector<32x1xf32>
    %12 = vector.shape_cast %8 : vector<16x1xf32> to vector<16x1xf32>
    %13 = vector.broadcast %12 : vector<16x1xf32> to vector<16x128xf32>
    %14 = vector.shape_cast %6 : vector<16x1xf32> to vector<16x1xf32>
    %15 = vector.broadcast %14 : vector<16x1xf32> to vector<16x128xf32>
    %16 = vector.shape_cast %7 : vector<16x1xf32> to vector<16x1xf32>
    %17 = vector.broadcast %16 : vector<16x1xf32> to vector<16x128xf32>
    %c0_3 = arith.constant 0 : index
    %c0_4 = arith.constant 0 : index
    %18 = vector.load %arg2[%c0_3, %c0_4] : memref<4x128xf32, #tpu.memory_space<vmem>>, vector<4x128xf32>
    %19 = vector.extract_strided_slice %18 {offsets = [0, 0], sizes = [1, 128], strides = [1, 1]} : vector<4x128xf32> to vector<1x128xf32>
    %20 = vector.extract_strided_slice %18 {offsets = [1, 0], sizes = [3, 128], strides = [1, 1]} : vector<4x128xf32> to vector<3x128xf32>
    %cst = arith.constant 1.000000e+00 : f32
    %21 = vector.broadcast %cst : f32 to vector<1x128xf32>
    %22 = arith.maximumf %19, %21 : vector<1x128xf32>
    %23 = tpu.reciprocal %22 {approx = true} : vector<1x128xf32> -> vector<1x128xf32>
    %24 = arith.mulf %22, %23 : vector<1x128xf32>
    %cst_5 = arith.constant 2.000000e+00 : f32
    %25 = vector.broadcast %cst_5 : f32 to vector<1x128xf32>
    %26 = arith.subf %25, %24 : vector<1x128xf32>
    %27 = arith.mulf %23, %26 : vector<1x128xf32>
    %c0_6 = arith.constant 0 : index
    %c0_7 = arith.constant 0 : index
    %28 = vector.load %arg1[%c0_6, %c0_7] : memref<32x128xf32, #tpu.memory_space<vmem>>, vector<3x128xf32>
    %c4 = arith.constant 4 : index
    %c0_8 = arith.constant 0 : index
    %29 = vector.load %arg1[%c4, %c0_8] : memref<32x128xf32, #tpu.memory_space<vmem>>, vector<3x128xf32>
    %30 = arith.addf %28, %29 : vector<3x128xf32>
    %c8 = arith.constant 8 : index
    %c0_9 = arith.constant 0 : index
    %31 = vector.load %arg1[%c8, %c0_9] : memref<32x128xf32, #tpu.memory_space<vmem>>, vector<3x128xf32>
    %32 = arith.addf %30, %31 : vector<3x128xf32>
    %c12 = arith.constant 12 : index
    %c0_10 = arith.constant 0 : index
    %33 = vector.load %arg1[%c12, %c0_10] : memref<32x128xf32, #tpu.memory_space<vmem>>, vector<3x128xf32>
    %34 = arith.addf %32, %33 : vector<3x128xf32>
    %c16 = arith.constant 16 : index
    %c0_11 = arith.constant 0 : index
    %35 = vector.load %arg1[%c16, %c0_11] : memref<32x128xf32, #tpu.memory_space<vmem>>, vector<3x128xf32>
    %36 = arith.addf %34, %35 : vector<3x128xf32>
    %c20 = arith.constant 20 : index
    %c0_12 = arith.constant 0 : index
    %37 = vector.load %arg1[%c20, %c0_12] : memref<32x128xf32, #tpu.memory_space<vmem>>, vector<3x128xf32>
    %38 = arith.addf %36, %37 : vector<3x128xf32>
    %c24 = arith.constant 24 : index
    %c0_13 = arith.constant 0 : index
    %39 = vector.load %arg1[%c24, %c0_13] : memref<32x128xf32, #tpu.memory_space<vmem>>, vector<3x128xf32>
    %40 = arith.addf %38, %39 : vector<3x128xf32>
    %c28 = arith.constant 28 : index
    %c0_14 = arith.constant 0 : index
    %41 = vector.load %arg1[%c28, %c0_14] : memref<32x128xf32, #tpu.memory_space<vmem>>, vector<3x128xf32>
    %42 = arith.addf %40, %41 : vector<3x128xf32>
    %43 = vector.broadcast %27 : vector<1x128xf32> to vector<3x128xf32>
    %44 = arith.mulf %42, %43 : vector<3x128xf32>
    %cst_15 = arith.constant dense<0.000000e+00> : vector<16x128xf32>
    %45 = tpu.matmul %4, %20, %cst_15 {dimension_numbers = #tpu.dot_dimension_numbers<[1], [0], [0], [1], [0, 0, 1, 1], [], []>} : vector<16x3xf32>, vector<3x128xf32>, vector<16x128xf32> -> vector<16x128xf32>
    %cst_16 = arith.constant dense<0.000000e+00> : vector<16x128xf32>
    %46 = tpu.matmul %5, %44, %cst_16 {dimension_numbers = #tpu.dot_dimension_numbers<[1], [0], [0], [1], [0, 0, 1, 1], [], []>} : vector<16x3xf32>, vector<3x128xf32>, vector<16x128xf32> -> vector<16x128xf32>
    %47 = arith.subf %45, %46 : vector<16x128xf32>
    %c0_17 = arith.constant 0 : index
    %c0_18 = arith.constant 0 : index
    %48 = vector.load %arg1[%c0_17, %c0_18] : memref<32x128xf32, #tpu.memory_space<vmem>>, vector<4x128xf32>
    %49 = vector.extract_strided_slice %48 {offsets = [0, 0], sizes = [3, 128], strides = [1, 1]} : vector<4x128xf32> to vector<3x128xf32>
    %50 = arith.subf %49, %20 : vector<3x128xf32>
    %51 = arith.truncf %50 : vector<3x128xf32> to vector<3x128xbf16>
    %52 = arith.mulf %49, %49 : vector<3x128xf32>
    %cst_19 = arith.constant dense<0.000000e+00> : vector<128xf32>
    %53 = vector.multi_reduction <add>, %52, %cst_19 [0] : vector<3x128xf32> to vector<128xf32>
    %54 = vector.shape_cast %53 : vector<128xf32> to vector<1x128xf32>
    %55 = math.sqrt %54 : vector<1x128xf32>
    %cst_20 = arith.constant dense<0.000000e+00> : vector<16x128xf32>
    %56 = tpu.matmul %3, %51, %cst_20 {dimension_numbers = #tpu.dot_dimension_numbers<[1], [0], [0], [1], [0, 0, 1, 1], [], []>} : vector<16x3xbf16>, vector<3x128xbf16>, vector<16x128xf32> -> vector<16x128xf32>
    %57 = vector.extract_strided_slice %48 {offsets = [3, 0], sizes = [1, 128], strides = [1, 1]} : vector<4x128xf32> to vector<1x128xf32>
    %58 = vector.broadcast %57 : vector<1x128xf32> to vector<16x128xf32>
    %59 = arith.mulf %15, %58 : vector<16x128xf32>
    %60 = arith.addf %56, %59 : vector<16x128xf32>
    %61 = vector.broadcast %55 : vector<1x128xf32> to vector<16x128xf32>
    %62 = arith.mulf %17, %61 : vector<16x128xf32>
    %63 = arith.addf %60, %62 : vector<16x128xf32>
    %cst_21 = arith.constant 0.000000e+00 : f32
    %64 = vector.broadcast %cst_21 : f32 to vector<1x128xf32>
    %65 = arith.cmpf ogt, %19, %64 : vector<1x128xf32>
    %66 = arith.extui %65 : vector<1x128xi1> to vector<1x128xi32>
    %67 = arith.sitofp %66 : vector<1x128xi32> to vector<1x128xf32>
    %68 = arith.addf %63, %47 : vector<16x128xf32>
    %69 = vector.broadcast %67 : vector<1x128xf32> to vector<16x128xf32>
    %70 = arith.mulf %68, %69 : vector<16x128xf32>
    %71 = arith.addf %70, %13 : vector<16x128xf32>
    %cst_22 = arith.constant 0.000000e+00 : f32
    %72 = vector.broadcast %cst_22 : f32 to vector<16x128xf32>
    %73 = arith.maximumf %71, %72 : vector<16x128xf32>
    %cst_23 = arith.constant dense<0.000000e+00> : vector<32x128xf32>
    %74 = tpu.matmul %9, %73, %cst_23 {dimension_numbers = #tpu.dot_dimension_numbers<[1], [0], [0], [1], [0, 0, 1, 1], [], []>} : vector<32x16xf32>, vector<16x128xf32>, vector<32x128xf32> -> vector<32x128xf32>
    %c4_24 = arith.constant 4 : index
    %c0_25 = arith.constant 0 : index
    %75 = vector.load %arg1[%c4_24, %c0_25] : memref<32x128xf32, #tpu.memory_space<vmem>>, vector<4x128xf32>
    %76 = vector.extract_strided_slice %75 {offsets = [0, 0], sizes = [3, 128], strides = [1, 1]} : vector<4x128xf32> to vector<3x128xf32>
    %77 = arith.subf %76, %20 : vector<3x128xf32>
    %78 = arith.truncf %77 : vector<3x128xf32> to vector<3x128xbf16>
    %79 = arith.mulf %76, %76 : vector<3x128xf32>
    %cst_26 = arith.constant dense<0.000000e+00> : vector<128xf32>
    %80 = vector.multi_reduction <add>, %79, %cst_26 [0] : vector<3x128xf32> to vector<128xf32>
    %81 = vector.shape_cast %80 : vector<128xf32> to vector<1x128xf32>
    %82 = math.sqrt %81 : vector<1x128xf32>
    %cst_27 = arith.constant dense<0.000000e+00> : vector<16x128xf32>
    %83 = tpu.matmul %3, %78, %cst_27 {dimension_numbers = #tpu.dot_dimension_numbers<[1], [0], [0], [1], [0, 0, 1, 1], [], []>} : vector<16x3xbf16>, vector<3x128xbf16>, vector<16x128xf32> -> vector<16x128xf32>
    %84 = vector.extract_strided_slice %75 {offsets = [3, 0], sizes = [1, 128], strides = [1, 1]} : vector<4x128xf32> to vector<1x128xf32>
    %85 = vector.broadcast %84 : vector<1x128xf32> to vector<16x128xf32>
    %86 = arith.mulf %15, %85 : vector<16x128xf32>
    %87 = arith.addf %83, %86 : vector<16x128xf32>
    %88 = vector.broadcast %82 : vector<1x128xf32> to vector<16x128xf32>
    %89 = arith.mulf %17, %88 : vector<16x128xf32>
    %90 = arith.addf %87, %89 : vector<16x128xf32>
    %cst_28 = arith.constant 1.000000e+00 : f32
    %91 = vector.broadcast %cst_28 : f32 to vector<1x128xf32>
    %92 = arith.cmpf ogt, %19, %91 : vector<1x128xf32>
    %93 = arith.extui %92 : vector<1x128xi1> to vector<1x128xi32>
    %94 = arith.sitofp %93 : vector<1x128xi32> to vector<1x128xf32>
    %95 = arith.addf %90, %47 : vector<16x128xf32>
    %96 = vector.broadcast %94 : vector<1x128xf32> to vector<16x128xf32>
    %97 = arith.mulf %95, %96 : vector<16x128xf32>
    %98 = arith.addf %97, %13 : vector<16x128xf32>
    %cst_29 = arith.constant 0.000000e+00 : f32
    %99 = vector.broadcast %cst_29 : f32 to vector<16x128xf32>
    %100 = arith.maximumf %98, %99 : vector<16x128xf32>
    %cst_30 = arith.constant dense<0.000000e+00> : vector<32x128xf32>
    %101 = tpu.matmul %9, %100, %cst_30 {dimension_numbers = #tpu.dot_dimension_numbers<[1], [0], [0], [1], [0, 0, 1, 1], [], []>} : vector<32x16xf32>, vector<16x128xf32>, vector<32x128xf32> -> vector<32x128xf32>
    %102 = arith.maximumf %73, %100 : vector<16x128xf32>
    %103 = arith.maximumf %74, %101 : vector<32x128xf32>
    %c8_31 = arith.constant 8 : index
    %c0_32 = arith.constant 0 : index
    %104 = vector.load %arg1[%c8_31, %c0_32] : memref<32x128xf32, #tpu.memory_space<vmem>>, vector<4x128xf32>
    %105 = vector.extract_strided_slice %104 {offsets = [0, 0], sizes = [3, 128], strides = [1, 1]} : vector<4x128xf32> to vector<3x128xf32>
    %106 = arith.subf %105, %20 : vector<3x128xf32>
    %107 = arith.truncf %106 : vector<3x128xf32> to vector<3x128xbf16>
    %108 = arith.mulf %105, %105 : vector<3x128xf32>
    %cst_33 = arith.constant dense<0.000000e+00> : vector<128xf32>
    %109 = vector.multi_reduction <add>, %108, %cst_33 [0] : vector<3x128xf32> to vector<128xf32>
    %110 = vector.shape_cast %109 : vector<128xf32> to vector<1x128xf32>
    %111 = math.sqrt %110 : vector<1x128xf32>
    %cst_34 = arith.constant dense<0.000000e+00> : vector<16x128xf32>
    %112 = tpu.matmul %3, %107, %cst_34 {dimension_numbers = #tpu.dot_dimension_numbers<[1], [0], [0], [1], [0, 0, 1, 1], [], []>} : vector<16x3xbf16>, vector<3x128xbf16>, vector<16x128xf32> -> vector<16x128xf32>
    %113 = vector.extract_strided_slice %104 {offsets = [3, 0], sizes = [1, 128], strides = [1, 1]} : vector<4x128xf32> to vector<1x128xf32>
    %114 = vector.broadcast %113 : vector<1x128xf32> to vector<16x128xf32>
    %115 = arith.mulf %15, %114 : vector<16x128xf32>
    %116 = arith.addf %112, %115 : vector<16x128xf32>
    %117 = vector.broadcast %111 : vector<1x128xf32> to vector<16x128xf32>
    %118 = arith.mulf %17, %117 : vector<16x128xf32>
    %119 = arith.addf %116, %118 : vector<16x128xf32>
    %cst_35 = arith.constant 2.000000e+00 : f32
    %120 = vector.broadcast %cst_35 : f32 to vector<1x128xf32>
    %121 = arith.cmpf ogt, %19, %120 : vector<1x128xf32>
    %122 = arith.extui %121 : vector<1x128xi1> to vector<1x128xi32>
    %123 = arith.sitofp %122 : vector<1x128xi32> to vector<1x128xf32>
    %124 = arith.addf %119, %47 : vector<16x128xf32>
    %125 = vector.broadcast %123 : vector<1x128xf32> to vector<16x128xf32>
    %126 = arith.mulf %124, %125 : vector<16x128xf32>
    %127 = arith.addf %126, %13 : vector<16x128xf32>
    %cst_36 = arith.constant 0.000000e+00 : f32
    %128 = vector.broadcast %cst_36 : f32 to vector<16x128xf32>
    %129 = arith.maximumf %127, %128 : vector<16x128xf32>
    %cst_37 = arith.constant dense<0.000000e+00> : vector<32x128xf32>
    %130 = tpu.matmul %9, %129, %cst_37 {dimension_numbers = #tpu.dot_dimension_numbers<[1], [0], [0], [1], [0, 0, 1, 1], [], []>} : vector<32x16xf32>, vector<16x128xf32>, vector<32x128xf32> -> vector<32x128xf32>
    %131 = arith.maximumf %102, %129 : vector<16x128xf32>
    %132 = arith.maximumf %103, %130 : vector<32x128xf32>
    %c12_38 = arith.constant 12 : index
    %c0_39 = arith.constant 0 : index
    %133 = vector.load %arg1[%c12_38, %c0_39] : memref<32x128xf32, #tpu.memory_space<vmem>>, vector<4x128xf32>
    %134 = vector.extract_strided_slice %133 {offsets = [0, 0], sizes = [3, 128], strides = [1, 1]} : vector<4x128xf32> to vector<3x128xf32>
    %135 = arith.subf %134, %20 : vector<3x128xf32>
    %136 = arith.truncf %135 : vector<3x128xf32> to vector<3x128xbf16>
    %137 = arith.mulf %134, %134 : vector<3x128xf32>
    %cst_40 = arith.constant dense<0.000000e+00> : vector<128xf32>
    %138 = vector.multi_reduction <add>, %137, %cst_40 [0] : vector<3x128xf32> to vector<128xf32>
    %139 = vector.shape_cast %138 : vector<128xf32> to vector<1x128xf32>
    %140 = math.sqrt %139 : vector<1x128xf32>
    %cst_41 = arith.constant dense<0.000000e+00> : vector<16x128xf32>
    %141 = tpu.matmul %3, %136, %cst_41 {dimension_numbers = #tpu.dot_dimension_numbers<[1], [0], [0], [1], [0, 0, 1, 1], [], []>} : vector<16x3xbf16>, vector<3x128xbf16>, vector<16x128xf32> -> vector<16x128xf32>
    %142 = vector.extract_strided_slice %133 {offsets = [3, 0], sizes = [1, 128], strides = [1, 1]} : vector<4x128xf32> to vector<1x128xf32>
    %143 = vector.broadcast %142 : vector<1x128xf32> to vector<16x128xf32>
    %144 = arith.mulf %15, %143 : vector<16x128xf32>
    %145 = arith.addf %141, %144 : vector<16x128xf32>
    %146 = vector.broadcast %140 : vector<1x128xf32> to vector<16x128xf32>
    %147 = arith.mulf %17, %146 : vector<16x128xf32>
    %148 = arith.addf %145, %147 : vector<16x128xf32>
    %cst_42 = arith.constant 3.000000e+00 : f32
    %149 = vector.broadcast %cst_42 : f32 to vector<1x128xf32>
    %150 = arith.cmpf ogt, %19, %149 : vector<1x128xf32>
    %151 = arith.extui %150 : vector<1x128xi1> to vector<1x128xi32>
    %152 = arith.sitofp %151 : vector<1x128xi32> to vector<1x128xf32>
    %153 = arith.addf %148, %47 : vector<16x128xf32>
    %154 = vector.broadcast %152 : vector<1x128xf32> to vector<16x128xf32>
    %155 = arith.mulf %153, %154 : vector<16x128xf32>
    %156 = arith.addf %155, %13 : vector<16x128xf32>
    %cst_43 = arith.constant 0.000000e+00 : f32
    %157 = vector.broadcast %cst_43 : f32 to vector<16x128xf32>
    %158 = arith.maximumf %156, %157 : vector<16x128xf32>
    %cst_44 = arith.constant dense<0.000000e+00> : vector<32x128xf32>
    %159 = tpu.matmul %9, %158, %cst_44 {dimension_numbers = #tpu.dot_dimension_numbers<[1], [0], [0], [1], [0, 0, 1, 1], [], []>} : vector<32x16xf32>, vector<16x128xf32>, vector<32x128xf32> -> vector<32x128xf32>
    %160 = arith.maximumf %131, %158 : vector<16x128xf32>
    %161 = arith.maximumf %132, %159 : vector<32x128xf32>
    %c16_45 = arith.constant 16 : index
    %c0_46 = arith.constant 0 : index
    %162 = vector.load %arg1[%c16_45, %c0_46] : memref<32x128xf32, #tpu.memory_space<vmem>>, vector<4x128xf32>
    %163 = vector.extract_strided_slice %162 {offsets = [0, 0], sizes = [3, 128], strides = [1, 1]} : vector<4x128xf32> to vector<3x128xf32>
    %164 = arith.subf %163, %20 : vector<3x128xf32>
    %165 = arith.truncf %164 : vector<3x128xf32> to vector<3x128xbf16>
    %166 = arith.mulf %163, %163 : vector<3x128xf32>
    %cst_47 = arith.constant dense<0.000000e+00> : vector<128xf32>
    %167 = vector.multi_reduction <add>, %166, %cst_47 [0] : vector<3x128xf32> to vector<128xf32>
    %168 = vector.shape_cast %167 : vector<128xf32> to vector<1x128xf32>
    %169 = math.sqrt %168 : vector<1x128xf32>
    %cst_48 = arith.constant dense<0.000000e+00> : vector<16x128xf32>
    %170 = tpu.matmul %3, %165, %cst_48 {dimension_numbers = #tpu.dot_dimension_numbers<[1], [0], [0], [1], [0, 0, 1, 1], [], []>} : vector<16x3xbf16>, vector<3x128xbf16>, vector<16x128xf32> -> vector<16x128xf32>
    %171 = vector.extract_strided_slice %162 {offsets = [3, 0], sizes = [1, 128], strides = [1, 1]} : vector<4x128xf32> to vector<1x128xf32>
    %172 = vector.broadcast %171 : vector<1x128xf32> to vector<16x128xf32>
    %173 = arith.mulf %15, %172 : vector<16x128xf32>
    %174 = arith.addf %170, %173 : vector<16x128xf32>
    %175 = vector.broadcast %169 : vector<1x128xf32> to vector<16x128xf32>
    %176 = arith.mulf %17, %175 : vector<16x128xf32>
    %177 = arith.addf %174, %176 : vector<16x128xf32>
    %cst_49 = arith.constant 4.000000e+00 : f32
    %178 = vector.broadcast %cst_49 : f32 to vector<1x128xf32>
    %179 = arith.cmpf ogt, %19, %178 : vector<1x128xf32>
    %180 = arith.extui %179 : vector<1x128xi1> to vector<1x128xi32>
    %181 = arith.sitofp %180 : vector<1x128xi32> to vector<1x128xf32>
    %182 = arith.addf %177, %47 : vector<16x128xf32>
    %183 = vector.broadcast %181 : vector<1x128xf32> to vector<16x128xf32>
    %184 = arith.mulf %182, %183 : vector<16x128xf32>
    %185 = arith.addf %184, %13 : vector<16x128xf32>
    %cst_50 = arith.constant 0.000000e+00 : f32
    %186 = vector.broadcast %cst_50 : f32 to vector<16x128xf32>
    %187 = arith.maximumf %185, %186 : vector<16x128xf32>
    %cst_51 = arith.constant dense<0.000000e+00> : vector<32x128xf32>
    %188 = tpu.matmul %9, %187, %cst_51 {dimension_numbers = #tpu.dot_dimension_numbers<[1], [0], [0], [1], [0, 0, 1, 1], [], []>} : vector<32x16xf32>, vector<16x128xf32>, vector<32x128xf32> -> vector<32x128xf32>
    %189 = arith.maximumf %160, %187 : vector<16x128xf32>
    %190 = arith.maximumf %161, %188 : vector<32x128xf32>
    %c20_52 = arith.constant 20 : index
    %c0_53 = arith.constant 0 : index
    %191 = vector.load %arg1[%c20_52, %c0_53] : memref<32x128xf32, #tpu.memory_space<vmem>>, vector<4x128xf32>
    %192 = vector.extract_strided_slice %191 {offsets = [0, 0], sizes = [3, 128], strides = [1, 1]} : vector<4x128xf32> to vector<3x128xf32>
    %193 = arith.subf %192, %20 : vector<3x128xf32>
    %194 = arith.truncf %193 : vector<3x128xf32> to vector<3x128xbf16>
    %195 = arith.mulf %192, %192 : vector<3x128xf32>
    %cst_54 = arith.constant dense<0.000000e+00> : vector<128xf32>
    %196 = vector.multi_reduction <add>, %195, %cst_54 [0] : vector<3x128xf32> to vector<128xf32>
    %197 = vector.shape_cast %196 : vector<128xf32> to vector<1x128xf32>
    %198 = math.sqrt %197 : vector<1x128xf32>
    %cst_55 = arith.constant dense<0.000000e+00> : vector<16x128xf32>
    %199 = tpu.matmul %3, %194, %cst_55 {dimension_numbers = #tpu.dot_dimension_numbers<[1], [0], [0], [1], [0, 0, 1, 1], [], []>} : vector<16x3xbf16>, vector<3x128xbf16>, vector<16x128xf32> -> vector<16x128xf32>
    %200 = vector.extract_strided_slice %191 {offsets = [3, 0], sizes = [1, 128], strides = [1, 1]} : vector<4x128xf32> to vector<1x128xf32>
    %201 = vector.broadcast %200 : vector<1x128xf32> to vector<16x128xf32>
    %202 = arith.mulf %15, %201 : vector<16x128xf32>
    %203 = arith.addf %199, %202 : vector<16x128xf32>
    %204 = vector.broadcast %198 : vector<1x128xf32> to vector<16x128xf32>
    %205 = arith.mulf %17, %204 : vector<16x128xf32>
    %206 = arith.addf %203, %205 : vector<16x128xf32>
    %cst_56 = arith.constant 5.000000e+00 : f32
    %207 = vector.broadcast %cst_56 : f32 to vector<1x128xf32>
    %208 = arith.cmpf ogt, %19, %207 : vector<1x128xf32>
    %209 = arith.extui %208 : vector<1x128xi1> to vector<1x128xi32>
    %210 = arith.sitofp %209 : vector<1x128xi32> to vector<1x128xf32>
    %211 = arith.addf %206, %47 : vector<16x128xf32>
    %212 = vector.broadcast %210 : vector<1x128xf32> to vector<16x128xf32>
    %213 = arith.mulf %211, %212 : vector<16x128xf32>
    %214 = arith.addf %213, %13 : vector<16x128xf32>
    %cst_57 = arith.constant 0.000000e+00 : f32
    %215 = vector.broadcast %cst_57 : f32 to vector<16x128xf32>
    %216 = arith.maximumf %214, %215 : vector<16x128xf32>
    %cst_58 = arith.constant dense<0.000000e+00> : vector<32x128xf32>
    %217 = tpu.matmul %9, %216, %cst_58 {dimension_numbers = #tpu.dot_dimension_numbers<[1], [0], [0], [1], [0, 0, 1, 1], [], []>} : vector<32x16xf32>, vector<16x128xf32>, vector<32x128xf32> -> vector<32x128xf32>
    %218 = arith.maximumf %189, %216 : vector<16x128xf32>
    %219 = arith.maximumf %190, %217 : vector<32x128xf32>
    %c24_59 = arith.constant 24 : index
    %c0_60 = arith.constant 0 : index
    %220 = vector.load %arg1[%c24_59, %c0_60] : memref<32x128xf32, #tpu.memory_space<vmem>>, vector<4x128xf32>
    %221 = vector.extract_strided_slice %220 {offsets = [0, 0], sizes = [3, 128], strides = [1, 1]} : vector<4x128xf32> to vector<3x128xf32>
    %222 = arith.subf %221, %20 : vector<3x128xf32>
    %223 = arith.truncf %222 : vector<3x128xf32> to vector<3x128xbf16>
    %224 = arith.mulf %221, %221 : vector<3x128xf32>
    %cst_61 = arith.constant dense<0.000000e+00> : vector<128xf32>
    %225 = vector.multi_reduction <add>, %224, %cst_61 [0] : vector<3x128xf32> to vector<128xf32>
    %226 = vector.shape_cast %225 : vector<128xf32> to vector<1x128xf32>
    %227 = math.sqrt %226 : vector<1x128xf32>
    %cst_62 = arith.constant dense<0.000000e+00> : vector<16x128xf32>
    %228 = tpu.matmul %3, %223, %cst_62 {dimension_numbers = #tpu.dot_dimension_numbers<[1], [0], [0], [1], [0, 0, 1, 1], [], []>} : vector<16x3xbf16>, vector<3x128xbf16>, vector<16x128xf32> -> vector<16x128xf32>
    %229 = vector.extract_strided_slice %220 {offsets = [3, 0], sizes = [1, 128], strides = [1, 1]} : vector<4x128xf32> to vector<1x128xf32>
    %230 = vector.broadcast %229 : vector<1x128xf32> to vector<16x128xf32>
    %231 = arith.mulf %15, %230 : vector<16x128xf32>
    %232 = arith.addf %228, %231 : vector<16x128xf32>
    %233 = vector.broadcast %227 : vector<1x128xf32> to vector<16x128xf32>
    %234 = arith.mulf %17, %233 : vector<16x128xf32>
    %235 = arith.addf %232, %234 : vector<16x128xf32>
    %cst_63 = arith.constant 6.000000e+00 : f32
    %236 = vector.broadcast %cst_63 : f32 to vector<1x128xf32>
    %237 = arith.cmpf ogt, %19, %236 : vector<1x128xf32>
    %238 = arith.extui %237 : vector<1x128xi1> to vector<1x128xi32>
    %239 = arith.sitofp %238 : vector<1x128xi32> to vector<1x128xf32>
    %240 = arith.addf %235, %47 : vector<16x128xf32>
    %241 = vector.broadcast %239 : vector<1x128xf32> to vector<16x128xf32>
    %242 = arith.mulf %240, %241 : vector<16x128xf32>
    %243 = arith.addf %242, %13 : vector<16x128xf32>
    %cst_64 = arith.constant 0.000000e+00 : f32
    %244 = vector.broadcast %cst_64 : f32 to vector<16x128xf32>
    %245 = arith.maximumf %243, %244 : vector<16x128xf32>
    %cst_65 = arith.constant dense<0.000000e+00> : vector<32x128xf32>
    %246 = tpu.matmul %9, %245, %cst_65 {dimension_numbers = #tpu.dot_dimension_numbers<[1], [0], [0], [1], [0, 0, 1, 1], [], []>} : vector<32x16xf32>, vector<16x128xf32>, vector<32x128xf32> -> vector<32x128xf32>
    %247 = arith.maximumf %218, %245 : vector<16x128xf32>
    %248 = arith.maximumf %219, %246 : vector<32x128xf32>
    %c28_66 = arith.constant 28 : index
    %c0_67 = arith.constant 0 : index
    %249 = vector.load %arg1[%c28_66, %c0_67] : memref<32x128xf32, #tpu.memory_space<vmem>>, vector<4x128xf32>
    %250 = vector.extract_strided_slice %249 {offsets = [0, 0], sizes = [3, 128], strides = [1, 1]} : vector<4x128xf32> to vector<3x128xf32>
    %251 = arith.subf %250, %20 : vector<3x128xf32>
    %252 = arith.truncf %251 : vector<3x128xf32> to vector<3x128xbf16>
    %253 = arith.mulf %250, %250 : vector<3x128xf32>
    %cst_68 = arith.constant dense<0.000000e+00> : vector<128xf32>
    %254 = vector.multi_reduction <add>, %253, %cst_68 [0] : vector<3x128xf32> to vector<128xf32>
    %255 = vector.shape_cast %254 : vector<128xf32> to vector<1x128xf32>
    %256 = math.sqrt %255 : vector<1x128xf32>
    %cst_69 = arith.constant dense<0.000000e+00> : vector<16x128xf32>
    %257 = tpu.matmul %3, %252, %cst_69 {dimension_numbers = #tpu.dot_dimension_numbers<[1], [0], [0], [1], [0, 0, 1, 1], [], []>} : vector<16x3xbf16>, vector<3x128xbf16>, vector<16x128xf32> -> vector<16x128xf32>
    %258 = vector.extract_strided_slice %249 {offsets = [3, 0], sizes = [1, 128], strides = [1, 1]} : vector<4x128xf32> to vector<1x128xf32>
    %259 = vector.broadcast %258 : vector<1x128xf32> to vector<16x128xf32>
    %260 = arith.mulf %15, %259 : vector<16x128xf32>
    %261 = arith.addf %257, %260 : vector<16x128xf32>
    %262 = vector.broadcast %256 : vector<1x128xf32> to vector<16x128xf32>
    %263 = arith.mulf %17, %262 : vector<16x128xf32>
    %264 = arith.addf %261, %263 : vector<16x128xf32>
    %cst_70 = arith.constant 7.000000e+00 : f32
    %265 = vector.broadcast %cst_70 : f32 to vector<1x128xf32>
    %266 = arith.cmpf ogt, %19, %265 : vector<1x128xf32>
    %267 = arith.extui %266 : vector<1x128xi1> to vector<1x128xi32>
    %268 = arith.sitofp %267 : vector<1x128xi32> to vector<1x128xf32>
    %269 = arith.addf %264, %47 : vector<16x128xf32>
    %270 = vector.broadcast %268 : vector<1x128xf32> to vector<16x128xf32>
    %271 = arith.mulf %269, %270 : vector<16x128xf32>
    %272 = arith.addf %271, %13 : vector<16x128xf32>
    %cst_71 = arith.constant 0.000000e+00 : f32
    %273 = vector.broadcast %cst_71 : f32 to vector<16x128xf32>
    %274 = arith.maximumf %272, %273 : vector<16x128xf32>
    %cst_72 = arith.constant dense<0.000000e+00> : vector<32x128xf32>
    %275 = tpu.matmul %9, %274, %cst_72 {dimension_numbers = #tpu.dot_dimension_numbers<[1], [0], [0], [1], [0, 0, 1, 1], [], []>} : vector<32x16xf32>, vector<16x128xf32>, vector<32x128xf32> -> vector<32x128xf32>
    %276 = arith.maximumf %247, %274 : vector<16x128xf32>
    %277 = arith.maximumf %248, %275 : vector<32x128xf32>
    %cst_73 = arith.constant dense<0.000000e+00> : vector<32x128xf32>
    %278 = tpu.matmul %10, %276, %cst_73 {dimension_numbers = #tpu.dot_dimension_numbers<[1], [0], [0], [1], [0, 0, 1, 1], [], []>} : vector<32x16xf32>, vector<16x128xf32>, vector<32x128xf32> -> vector<32x128xf32>
    %279 = arith.addf %277, %278 : vector<32x128xf32>
    %280 = vector.broadcast %11 : vector<32x1xf32> to vector<32x128xf32>
    %281 = arith.addf %279, %280 : vector<32x128xf32>
    %cst_74 = arith.constant 0.000000e+00 : f32
    %282 = vector.broadcast %cst_74 : f32 to vector<32x128xf32>
    %283 = arith.maximumf %281, %282 : vector<32x128xf32>
    %c0_75 = arith.constant 0 : index
    %c0_76 = arith.constant 0 : index
    %284 = vector.load %arg5[%c0_75, %c0_76] : memref<32x128xf32, #tpu.memory_space<vmem>>, vector<32x128xf32>
    tpu.vector_store %arg5[%c0_75, %c0_76], %283 {strides = array<i32>} : memref<32x128xf32, #tpu.memory_space<vmem>>, vector<32x128xf32>,
    return
  }
  func.func @transform_0(%arg0: i32) -> (i32, i32) {
    %c0_i32 = arith.constant 0 : i32
    %c0_i32_0 = arith.constant 0 : i32
    return %c0_i32, %arg0 : i32, i32
  }
  func.func @transform_1(%arg0: i32) -> (i32, i32) {
    %c0_i32 = arith.constant 0 : i32
    %c0_i32_0 = arith.constant 0 : i32
    return %c0_i32, %arg0 : i32, i32
  }
  func.func @transform_2(%arg0: i32) -> (i32, i32) {
    %c0_i32 = arith.constant 0 : i32
    %c0_i32_0 = arith.constant 0 : i32
    %c0_i32_1 = arith.constant 0 : i32
    return %c0_i32, %c0_i32_0 : i32, i32
  }
  func.func @transform_3(%arg0: i32) -> (i32, i32) {
    %c0_i32 = arith.constant 0 : i32
    %c0_i32_0 = arith.constant 0 : i32
    %c0_i32_1 = arith.constant 0 : i32
    return %c0_i32, %c0_i32_0 : i32, i32
  }
  func.func @transform_4(%arg0: i32) -> (i32, i32) {
    %c0_i32 = arith.constant 0 : i32
    %c0_i32_0 = arith.constant 0 : i32
    return %c0_i32, %arg0 : i32, i32
  }
}

</mosaic_0001>

<llo_original>
// kernel: tpu_custom_call.1
$region0: #{tpu_custom_call.1}
  #allocation0 [shape = 'u32[]', space=smem, size = 0x4, offset = 0x4, fixed_abs, tag = 'smem constant byte address 0x4 - core index']
  #allocation1 [shape = 'u32[144,128]{1,0:T(1,128)}', space=vmem, size = 0x12000, scoped, tag = 'internal scratch']
  %s0 = inlined_call_operand.hbm [shape: f32[32,1024], index: 0, kind: input, shape index: {}]
  %s1 = inlined_call_operand.hbm [shape: f32[4,1024], index: 1, kind: input, shape index: {}]
  %s2 = inlined_call_operand.hbm [shape: f32[16,12], index: 2, kind: input, shape index: {}]
  %s3 = inlined_call_operand.hbm [shape: f32[32,33], index: 3, kind: input, shape index: {}]
  %s4 = inlined_call_operand.hbm [shape: f32[32,1024], index: 4, kind: output, shape index: {}]
  %s5 = sld [smem:[#allocation0]]
  $region65: #{tpu_custom_call.1} parent=0
    _
  %s7 = ssub.s32 1, %s5
  %s8 = scalar_select 0, %s7, %s5
  $region1: #{tpu_custom_call.1} parent=0
    #allocation2 [shape = 'u8[32768]{0}', space=vmem, size = 0x8000, scoped, tag = 'input window, operand 0']
    #allocation3 [shape = 's32[2]{0}', space=sflag, size = 0x8, scoped, tag = 'scoped memory for tpu_custom_call.1']
    #allocation4 [shape = 's32[2]{0}', space=sflag, size = 0x8, scoped, tag = 'scoped memory for tpu_custom_call.1']
    #allocation5 [shape = 'u8[4096]{0}', space=vmem, size = 0x1000, scoped, tag = 'input window, operand 1']
    #allocation6 [shape = 's32[2]{0}', space=sflag, size = 0x8, scoped, tag = 'scoped memory for tpu_custom_call.1']
    #allocation7 [shape = 'u8[8192]{0}', space=vmem, size = 0x2000, scoped, tag = 'input window, operand 2, single buffered']
    #allocation8 [shape = 'u8[16384]{0}', space=vmem, size = 0x4000, scoped, tag = 'input window, operand 3, single buffered']
    #allocation9 [shape = 's32[1]{0}', space=sflag, size = 0x4, scoped, tag = 'scoped memory for tpu_custom_call.1']
    #allocation10 [shape = 'u8[32768]{0}', space=vmem, size = 0x8000, scoped, tag = 'output window, operand 0']
    %9 = vsyncpa [#allocation3], 0
    %s10 = scalar_lea.sflag [#allocation3], 1
    %11 = vsyncpa %s10, 0
    %12 = vsyncpa [#allocation6], 0
    %s13 = scalar_lea.sflag [#allocation6], 1
    %14 = vsyncpa %s13, 0
    %15 = vsyncpa [#allocation9], 0
    %16 = vsyncpa [#allocation4], 0
    %s17 = scalar_lea.sflag [#allocation4], 1
    %18 = vsyncpa %s17, 0
    loop: start=0, step=1, limit=10
    $region2: #{tpu_custom_call.1} parent=1 // loop_pre_header
      _
    $region3: #{tpu_custom_call.1} parent=1 // loop_header
      %s20 = sphi 0, %s24
      %p21 = scmp.ge.s32.totalorder %s20, 10
      %s30 = sphi 0, %s32
      %s33 = sphi 0, %s30
      %s34 = sphi 0, %s33
      %s50 = sphi 0, %s34
      %s56 = sphi 0, %s58
      %s59 = sphi 0, %s56
      %s60 = sphi 0, %s59
      %s76 = sphi 0, %s60
      %s80 = sphi 0, %s80
      %s82 = sphi 0, %s80
      %s83 = sphi 0, %s82
      %s97 = sphi 0, %s83
      %s101 = sphi 0, %s101
      %s103 = sphi 0, %s101
      %s104 = sphi 0, %s103
      %s118 = sphi 0, %s104
      %s124 = sphi 0, %s126
      %s127 = sphi 0, %s124
      %s128 = sphi 0, %s127
      %s144 = sphi 0, %s128
    $region4: #{tpu_custom_call.1} parent=1 // loop_header_branch
      %23 = sbr.rel (%p21) target = $region8
    $region5: #{tpu_custom_call.1} parent=1 // loop_body
      %s25 = ssub.s32 %s20, 1
      %s26 = ssub.s32 %s20, 2
      %s27 = sadd.s32 %s20, 1
      %s28 = ssub.s32 %s20, %s27
      %p29 = scmp.eq.s32.totalorder %s28, 0
      %s31 = sadd.s32 %s30, 1
      %s32 = scalar_select %p29, %s30, %s31
      %p35 = pneg %p29
      %p36 = scmp.eq.s32.totalorder %s20, 7
      %p37 = por %p35, %p36
      %p38 = scmp.ne.s32.totalorder %s30, %s33
      %p39 = scmp.eq.s32.totalorder %s20, 0
      %p40 = por %p38, %p39
      %p41 = scmp.ne.s32.totalorder %s30, %s33
      %p42 = scmp.eq.s32.totalorder %s25, 7
      %p43 = por %p41, %p42
      %p44 = scmp.ne.s32.totalorder %s33, %s34
      %p45 = scmp.eq.s32.totalorder %s25, 0
      %p46 = por %p44, %p45
      %p47 = scmp.ne.s32.totalorder %s33, %s34
      %p48 = scmp.eq.s32.totalorder %s26, 7
      %p49 = por %p47, %p48
      %p51 = scmp.ne.s32.totalorder %s34, %s50
      %p52 = scmp.eq.s32.totalorder %s26, 0
      %p53 = por %p51, %p52
      %s54 = ssub.s32 %s20, %s27
      %p55 = scmp.eq.s32.totalorder %s54, 0
      %s57 = sadd.s32 %s56, 1
      %s58 = scalar_select %p55, %s56, %s57
      %p61 = pneg %p55
      %p62 = scmp.eq.s32.totalorder %s20, 7
      %p63 = por %p61, %p62
      %p64 = scmp.ne.s32.totalorder %s56, %s59
      %p65 = scmp.eq.s32.totalorder %s20, 0
      %p66 = por %p64, %p65
      %p67 = scmp.ne.s32.totalorder %s56, %s59
      %p68 = scmp.eq.s32.totalorder %s25, 7
      %p69 = por %p67, %p68
      %p70 = scmp.ne.s32.totalorder %s59, %s60
      %p71 = scmp.eq.s32.totalorder %s25, 0
      %p72 = por %p70, %p71
      %p73 = scmp.ne.s32.totalorder %s59, %s60
      %p74 = scmp.eq.s32.totalorder %s26, 7
      %p75 = por %p73, %p74
      %p77 = scmp.ne.s32.totalorder %s60, %s76
      %p78 = scmp.eq.s32.totalorder %s26, 0
      %p79 = por %p77, %p78
      %s81 = sadd.s32 %s80, 1
      %p84 = scmp.eq.s32.totalorder %s20, 7
      %p85 = scmp.ne.s32.totalorder %s80, %s82
      %p86 = scmp.eq.s32.totalorder %s20, 0
      %p87 = por %p85, %p86
      %p88 = scmp.ne.s32.totalorder %s80, %s82
      %p89 = scmp.eq.s32.totalorder %s25, 7
      %p90 = por %p88, %p89
      %p91 = scmp.ne.s32.totalorder %s82, %s83
      %p92 = scmp.eq.s32.totalorder %s25, 0
      %p93 = por %p91, %p92
      %p94 = scmp.ne.s32.totalorder %s82, %s83
      %p95 = scmp.eq.s32.totalorder %s26, 7
      %p96 = por %p94, %p95
      %p98 = scmp.ne.s32.totalorder %s83, %s97
      %p99 = scmp.eq.s32.totalorder %s26, 0
      %p100 = por %p98, %p99
      %s102 = sadd.s32 %s101, 1
      %p105 = scmp.eq.s32.totalorder %s20, 7
      %p106 = scmp.ne.s32.totalorder %s101, %s103
      %p107 = scmp.eq.s32.totalorder %s20, 0
      %p108 = por %p106, %p107
      %p109 = scmp.ne.s32.totalorder %s101, %s103
      %p110 = scmp.eq.s32.totalorder %s25, 7
      %p111 = por %p109, %p110
      %p112 = scmp.ne.s32.totalorder %s103, %s104
      %p113 = scmp.eq.s32.totalorder %s25, 0
      %p114 = por %p112, %p113
      %p115 = scmp.ne.s32.totalorder %s103, %s104
      %p116 = scmp.eq.s32.totalorder %s26, 7
      %p117 = por %p115, %p116
      %p119 = scmp.ne.s32.totalorder %s104, %s118
      %p120 = scmp.eq.s32.totalorder %s26, 0
      %p121 = por %p119, %p120
      %s122 = ssub.s32 %s20, %s27
      %p123 = scmp.eq.s32.totalorder %s122, 0
      %s125 = sadd.s32 %s124, 1
      %s126 = scalar_select %p123, %s124, %s125
      %p129 = pneg %p123
      %p130 = scmp.eq.s32.totalorder %s20, 7
      %p131 = por %p129, %p130
      %p132 = scmp.ne.s32.totalorder %s124, %s127
      %p133 = scmp.eq.s32.totalorder %s20, 0
      %p134 = por %p132, %p133
      %p135 = scmp.ne.s32.totalorder %s124, %s127
      %p136 = scmp.eq.s32.totalorder %s25, 7
      %p137 = por %p135, %p136
      %p138 = scmp.ne.s32.totalorder %s127, %s128
      %p139 = scmp.eq.s32.totalorder %s25, 0
      %p140 = por %p138, %p139
      %p141 = scmp.ne.s32.totalorder %s127, %s128
      %p142 = scmp.eq.s32.totalorder %s26, 7
      %p143 = por %p141, %p142
      %p145 = scmp.ne.s32.totalorder %s128, %s144
      %p146 = scmp.eq.s32.totalorder %s26, 0
      %p147 = por %p145, %p146
      %p148 = scmp.le.s32.totalorder 1, %s20
      %p149 = scmp.lt.s32.totalorder %s20, 9
      %p150 = pnand %p148, %p149
      %p151 = pneg %p150
      // Predicated region
      $region9: #{tpu_custom_call.1} parent=5 // pred_check
        _
      $region10: #{tpu_custom_call.1} parent=5 // pred_check_branch
        %153 = sbr.rel (%p150) target = $region12
      $region11: #{tpu_custom_call.1} parent=5 // pred_region
        %s154 = ssub.s32 %s20, 1
        // Predicated region
        $region13: #{tpu_custom_call.1} parent=11 // pred_check
          %p155 = pneg %p93
        $region14: #{tpu_custom_call.1} parent=11 // pred_check_branch
          %157 = sbr.rel (%p155) target = $region16
        $region15: #{tpu_custom_call.1} parent=11 // pred_region
          %s159 = ssub.s32 256, 256
          %160 = vsyncadd [#allocation6], %s159
          %s161 = sshll.u32 [#allocation7], 4
          %s162 = int_to_ptr.vmem [resolvable:$true] %s161
          %167 = dma.hbm_to_vmem [thread:$0]  %s2, 256, %s162, [#allocation6], 128, 128, 8
        $region16: #{tpu_custom_call.1} parent=11 // pred_fallthru
          _
        // Predicated region
        $region17: #{tpu_custom_call.1} parent=11 // pred_check
          %p168 = pneg %p114
        $region18: #{tpu_custom_call.1} parent=11 // pred_check_branch
          %170 = sbr.rel (%p168) target = $region20
        $region19: #{tpu_custom_call.1} parent=11 // pred_region
          %s172 = ssub.s32 512, 512
          %173 = vsyncadd [#allocation9], %s172
          %s174 = sshll.u32 [#allocation8], 4
          %s175 = int_to_ptr.vmem [resolvable:$true] %s174
          %180 = dma.hbm_to_vmem [thread:$0]  %s3, 512, %s175, [#allocation9], 128, 128, 8
        $region20: #{tpu_custom_call.1} parent=11 // pred_fallthru
          _
      $region12: #{tpu_custom_call.1} parent=5 // pred_fallthru
        _
      %p181 = scmp.lt.s32.totalorder %s20, 8
      // Predicated region
      $region21: #{tpu_custom_call.1} parent=5 // pred_check
        %p182 = pneg %p181
      $region22: #{tpu_custom_call.1} parent=5 // pred_check_branch
        %184 = sbr.rel (%p182) target = $region24
      $region23: #{tpu_custom_call.1} parent=5 // pred_region
        // Predicated region
        $region25: #{tpu_custom_call.1} parent=23 // pred_check
          %p185 = pneg %p40
        $region26: #{tpu_custom_call.1} parent=23 // pred_check_branch
          %187 = sbr.rel (%p185) target = $region28
        $region27: #{tpu_custom_call.1} parent=23 // pred_region
          %s188 = sand.u32 %s30, 1
          %s189 = scalar_lea.sflag [#allocation3], %s188
          %s190 = sand.u32 %s30, 1
          %s191 = smul.addr %s190, 32
          %s192 = scalar_lea.vmem [#allocation2], %s191
          %s194 = ssub.s32 512, 512
          %195 = vsyncadd %s189, %s194
          %s196 = smul.addr %s20, 128
          %s197 = scalar_lea.hbm %s0, %s196
          %s198 = sshll.u32 %s192, 4
          %s199 = int_to_ptr.vmem [resolvable:$true] %s198
          %204 = dma.hbm_to_vmem [thread:$0]  %s197, 512, %s199, %s189, 1024, 128, 8
        $region28: #{tpu_custom_call.1} parent=23 // pred_fallthru
          _
        // Predicated region
        $region29: #{tpu_custom_call.1} parent=23 // pred_check
          %p205 = pneg %p66
        $region30: #{tpu_custom_call.1} parent=23 // pred_check_branch
          %207 = sbr.rel (%p205) target = $region32
        $region31: #{tpu_custom_call.1} parent=23 // pred_region
          %s208 = sand.u32 %s20, 1
          %s209 = scalar_lea.sflag [#allocation6], %s208
          %s210 = sand.u32 %s56, 1
          %s211 = smul.addr %s210, 4
          %s212 = scalar_lea.vmem [#allocation5], %s211
          %s214 = ssub.s32 64, 64
          %215 = vsyncadd %s209, %s214
          %s216 = smul.addr %s20, 64
          %s217 = scalar_lea.hbm %s1, %s216
          %s219 = sshll.u32 %s212, 4
          %s220 = int_to_ptr.vmem [resolvable:$true] %s219
          %222 = dma.hbm_to_vmem [thread:$0]  %s217, 64, %s220, %s209
        $region32: #{tpu_custom_call.1} parent=23 // pred_fallthru
          _
      $region24: #{tpu_custom_call.1} parent=5 // pred_fallthru
        _
      %p223 = scmp.le.s32.totalorder 1, %s20
      %p224 = scmp.lt.s32.totalorder %s20, 9
      %p225 = pnand %p223, %p224
      %p226 = pneg %p225
      // Predicated region
      $region33: #{tpu_custom_call.1} parent=5 // pred_check
        _
      $region34: #{tpu_custom_call.1} parent=5 // pred_check_branch
        %228 = sbr.rel (%p225) target = $region36
      $region35: #{tpu_custom_call.1} parent=5 // pred_region
        %s229 = ssub.s32 %s20, 1
        %s230 = sand.u32 %s33, 1
        %s231 = scalar_lea.sflag [#allocation3], %s230
        %s232 = sand.u32 %s33, 1
        %s233 = smul.addr %s232, 32
        %s234 = scalar_lea.vmem [#allocation2], %s233
        // Predicated region
        $region37: #{tpu_custom_call.1} parent=35 // pred_check
          %p235 = pneg %p46
        $region38: #{tpu_custom_call.1} parent=35 // pred_check_branch
          %237 = sbr.rel (%p235) target = $region40
        $region39: #{tpu_custom_call.1} parent=35 // pred_region
          %238 = dma.done %s231, 512
        $region40: #{tpu_custom_call.1} parent=35 // pred_fallthru
          _
        %s239 = sand.u32 %s25, 1
        %s240 = scalar_lea.sflag [#allocation6], %s239
        %s241 = sand.u32 %s59, 1
        %s242 = smul.addr %s241, 4
        %s243 = scalar_lea.vmem [#allocation5], %s242
        // Predicated region
        $region41: #{tpu_custom_call.1} parent=35 // pred_check
          %p244 = pneg %p72
        $region42: #{tpu_custom_call.1} parent=35 // pred_check_branch
          %246 = sbr.rel (%p244) target = $region44
        $region43: #{tpu_custom_call.1} parent=35 // pred_region
          %247 = dma.done %s240, 64
        $region44: #{tpu_custom_call.1} parent=35 // pred_fallthru
          _
        // Predicated region
        $region45: #{tpu_custom_call.1} parent=35 // pred_check
          %p248 = pneg %p93
        $region46: #{tpu_custom_call.1} parent=35 // pred_check_branch
          %250 = sbr.rel (%p248) target = $region48
        $region47: #{tpu_custom_call.1} parent=35 // pred_region
          %251 = dma.done [#allocation6], 256
        $region48: #{tpu_custom_call.1} parent=35 // pred_fallthru
          _
        // Predicated region
        $region49: #{tpu_custom_call.1} parent=35 // pred_check
          %p252 = pneg %p114
        $region50: #{tpu_custom_call.1} parent=35 // pred_check_branch
          %254 = sbr.rel (%p252) target = $region52
        $region51: #{tpu_custom_call.1} parent=35 // pred_region
          %255 = dma.done [#allocation9], 512
        $region52: #{tpu_custom_call.1} parent=35 // pred_fallthru
          _
        %s256 = sand.u32 %s33, 1
        %s257 = scalar_lea.sflag [#allocation3], %s256
        %s258 = sand.u32 %s33, 1
        %s259 = smul.addr %s258, 32
        %s260 = scalar_lea.vmem [#allocation2], %s259
        %p261 = pneg %p46
        %p262 = pneg %p43
        %s263 = sand.u32 %s25, 1
        %s264 = scalar_lea.sflag [#allocation6], %s263
        %s265 = sand.u32 %s59, 1
        %s266 = smul.addr %s265, 4
        %s267 = scalar_lea.vmem [#allocation5], %s266
        %p268 = pneg %p72
        %p269 = pneg %p69
        %p270 = pneg %p93
        %p271 = pneg %p90
        %p272 = pneg %p114
        %p273 = pneg %p111
        %p274 = pneg %p140
        %p275 = pneg %p137
        %s276 = sand.u32 %s127, 1
        %s277 = scalar_lea.sflag [#allocation4], %s276
        %s278 = sand.u32 %s127, 1
        %s279 = smul.addr %s278, 32
        %s280 = scalar_lea.vmem [#allocation10], %s279
        %v282 = vld [vmem:[#allocation7] sm:$0xff]
        %v283 = vld [vmem:[#allocation7 + $0x8] sm:$0xff]
        %v284 = vld [vmem:[#allocation8] sm:$0xff]
        %v285 = vld [vmem:[#allocation8 + $0x8] sm:$0xff]
        %v286 = vld [vmem:[#allocation8 + $0x10] sm:$0xff]
        %v287 = vld [vmem:[#allocation8 + $0x18] sm:$0xff]
        %v288 = vpack.c.bf16 %v283, %v282
        %290 = vset.pattern.permute.xlu0 11
        %291 = vperm.xlu0 %290, %v282
        %v292 = vpop.permute.xlu0 %291
        %295 = vset.pattern.permute.xlu0 11
        %296 = vperm.xlu0 %295, %v283
        %v297 = vpop.permute.xlu0 %296
        %299 = vset.pattern.permute.xlu0 9
        %300 = vperm.xlu0 %299, %v282
        %v301 = vpop.permute.xlu0 %300
        %303 = vset.pattern.permute.xlu0 9
        %304 = vperm.xlu0 %303, %v283
        %v305 = vpop.permute.xlu0 %304
        %307 = vset.pattern.permute.xlu0 10
        %308 = vperm.xlu0 %307, %v282
        %v309 = vpop.permute.xlu0 %308
        %311 = vset.pattern.permute.xlu0 10
        %312 = vperm.xlu0 %311, %v283
        %v313 = vpop.permute.xlu0 %312
        %v315 = vld [vmem:[%s243] sm:$0xf]
        %v316 = vmax.f32 %v315, 1.0
        %v317 = vrcp.pop %v316
        %v318 = vmul.f32 %v316, %v317
        %v319 = vsub.f32 2.0, %v318
        %v320 = vmul.f32 %v317, %v319
        %v321 = vld [vmem:[%s234] sm:$0x7]
        %v322 = vld [vmem:[%s234 + $0x4] sm:$0x7]
        %v323 = vadd.f32 %v321, %v322
        %v324 = vld [vmem:[%s234 + $0x8] sm:$0x7]
        %v325 = vadd.f32 %v323, %v324
        %v326 = vld [vmem:[%s234 + $0xc] sm:$0x7]
        %v327 = vadd.f32 %v325, %v326
        %v328 = vld [vmem:[%s234 + $0x10] sm:$0x7]
        %v329 = vadd.f32 %v327, %v328
        %v330 = vld [vmem:[%s234 + $0x14] sm:$0x7]
        %v331 = vadd.f32 %v329, %v330
        %v332 = vld [vmem:[%s234 + $0x18] sm:$0x7]
        %v333 = vadd.f32 %v331, %v332
        %v334 = vld [vmem:[%s234 + $0x1c] sm:$0x7]
        %v335 = vadd.f32 %v333, %v334
        %v336 = vlaneseq
        %v337 = vshrl.u32 %v336, 7
        %v338 = vsub.s32 0, %v337
        %v339 = vrot.slane %v320, %v338
        %v340 = vmul.f32 %v335, %v339
        %341 = vrot.lane.b32.xlu0 %v282, 125
        %v342 = vpop.permute.xlu0 %341
        %343 = vrot.lane.b32.xlu0 %v283, 125
        %v344 = vpop.permute.xlu0 %343
        %v346 = vrot.slane %v315, 1
        %vm347 = vcmask 23552
        %v348 = vsel %vm347, %v342, 0
        %v350 = vsel %vm347, %v344, 0
        %vm352 = vcmask 1042432
        %v353 = vsel %vm352, %v346, 0
        %355 = vmatprep.subr.mxu0 0.0
        %356 = vmatpush1.msra.mxu0 %v353
        %357 = vmatprep.subr.mxu0 0.0
        %358 = vmatpush1.msra.mxu0 0.0
        %359 = vmatprep.subr.mxu0 0.0
        %360 = vmatpush1.msra.mxu0 0.0
        %361 = vmatprep.subr.mxu0 0.0
        %362 = vmatpush1.msra.mxu0 0.0
        %363 = vmatprep.subr.mxu0 0.0
        %364 = vmatpush1.msra.mxu0 0.0
        %365 = vmatprep.subr.mxu0 0.0
        %366 = vmatpush1.msra.mxu0 0.0
        %367 = vmatprep.subr.mxu0 0.0
        %368 = vmatpush1.msra.mxu0 0.0
        %369 = vmatprep.subr.mxu0 0.0
        %370 = vmatpush1.msra.mxu0 0.0
        %371 = vmatprep.subr.mxu0 0.0
        %372 = vmatpush1.msra.mxu0 0.0
        %373 = vmatprep.subr.mxu0 0.0
        %374 = vmatpush1.msra.mxu0 0.0
        %375 = vmatprep.subr.mxu0 0.0
        %376 = vmatpush1.msra.mxu0 0.0
        %377 = vmatprep.subr.mxu0 0.0
        %378 = vmatpush1.msra.mxu0 0.0
        %379 = vmatprep.subr.mxu0 0.0
        %380 = vmatpush1.msra.mxu0 0.0
        %381 = vmatprep.subr.mxu0 0.0
        %382 = vmatpush1.msra.mxu0 0.0
        %383 = vmatprep.subr.mxu0 0.0
        %384 = vmatpush1.msra.mxu0 0.0
        %385 = vmatprep.subr.mxu0 0.0
        %386 = vmatpush1.msra.mxu0 0.0
        %387 = vmatprep.subr.mxu0 0.0
        %388 = vmatpush1.msra.mxu0 0.0
        %389 = vmatprep.subr.mxu0 0.0
        %390 = vmatpush1.msra.mxu0 0.0
        %391 = vmatprep.subr.mxu0 0.0
        %392 = vmatpush1.msra.mxu0 0.0
        %393 = vmatprep.subr.mxu0 0.0
        %394 = vmatpush1.msra.mxu0 0.0
        %395 = vmatprep.subr.mxu0 0.0
        %396 = vmatpush1.msra.mxu0 0.0
        %397 = vmatprep.subr.mxu0 0.0
        %398 = vmatpush1.msra.mxu0 0.0
        %399 = vmatprep.subr.mxu0 0.0
        %400 = vmatpush1.msra.mxu0 0.0
        %401 = vmatprep.subr.mxu0 0.0
        %402 = vmatpush1.msra.mxu0 0.0
        %403 = vmatprep.subr.mxu0 0.0
        %404 = vmatpush1.msra.mxu0 0.0
        %405 = vmatprep.subr.mxu0 0.0
        %406 = vmatpush1.msra.mxu0 0.0
        %407 = vmatprep.subr.mxu0 0.0
        %408 = vmatpush1.msra.mxu0 0.0
        %409 = vmatprep.subr.mxu0 0.0
        %410 = vmatpush1.msra.mxu0 0.0
        %411 = vmatprep.subr.mxu0 0.0
        %412 = vmatpush1.msra.mxu0 0.0
        %413 = vmatprep.subr.mxu0 0.0
        %414 = vmatpush1.msra.mxu0 0.0
        %415 = vmatprep.subr.mxu0 0.0
        %416 = vmatpush1.msra.mxu0 0.0
        %417 = vmatprep.subr.mxu0 0.0
        %418 = vmatpush1.msra.mxu0 0.0
        %419 = vmatprep.mubr.f32.mxu0 0.0
        %420 = vmatmul.mubr.f32.gmra.mrb[0].mxu0 %v348
        %v421 = vpop.f32.mrb[0].mxu0
        %v422 = vadd.f32 0.0, %v421
        %v423 = vpop.f32.mrb[0].mxu0
        %424 = vmatprep.mubr.f32.mxu0 0.0
        %425 = vmatmul.mubr.f32.gmra.mrb[0].mxu0 %v350
        %v426 = vpop.f32.mrb[0].mxu0
        %v427 = vadd.f32 0.0, %v426
        %v428 = vpop.f32.mrb[0].mxu0
        %429 = vdwg.mxu0
        %430 = vrot.lane.b32.xlu0 %v282, 122
        %v431 = vpop.permute.xlu0 %430
        %432 = vrot.lane.b32.xlu0 %v283, 122
        %v433 = vpop.permute.xlu0 %432
        %v434 = vsel %vm347, %v431, 0
        %v436 = vsel %vm347, %v433, 0
        %v439 = vsel %vm352, %v340, 0
        %441 = vmatprep.subr.mxu0 0.0
        %442 = vmatpush1.msra.mxu0 %v439
        %443 = vmatprep.subr.mxu0 0.0
        %444 = vmatpush1.msra.mxu0 0.0
        %445 = vmatprep.subr.mxu0 0.0
        %446 = vmatpush1.msra.mxu0 0.0
        %447 = vmatprep.subr.mxu0 0.0
        %448 = vmatpush1.msra.mxu0 0.0
        %449 = vmatprep.subr.mxu0 0.0
        %450 = vmatpush1.msra.mxu0 0.0
        %451 = vmatprep.subr.mxu0 0.0
        %452 = vmatpush1.msra.mxu0 0.0
        %453 = vmatprep.subr.mxu0 0.0
        %454 = vmatpush1.msra.mxu0 0.0
        %455 = vmatprep.subr.mxu0 0.0
        %456 = vmatpush1.msra.mxu0 0.0
        %457 = vmatprep.subr.mxu0 0.0
        %458 = vmatpush1.msra.mxu0 0.0
        %459 = vmatprep.subr.mxu0 0.0
        %460 = vmatpush1.msra.mxu0 0.0
        %461 = vmatprep.subr.mxu0 0.0
        %462 = vmatpush1.msra.mxu0 0.0
        %463 = vmatprep.subr.mxu0 0.0
        %464 = vmatpush1.msra.mxu0 0.0
        %465 = vmatprep.subr.mxu0 0.0
        %466 = vmatpush1.msra.mxu0 0.0
        %467 = vmatprep.subr.mxu0 0.0
        %468 = vmatpush1.msra.mxu0 0.0
        %469 = vmatprep.subr.mxu0 0.0
        %470 = vmatpush1.msra.mxu0 0.0
        %471 = vmatprep.subr.mxu0 0.0
        %472 = vmatpush1.msra.mxu0 0.0
        %473 = vmatprep.subr.mxu0 0.0
        %474 = vmatpush1.msra.mxu0 0.0
        %475 = vmatprep.subr.mxu0 0.0
        %476 = vmatpush1.msra.mxu0 0.0
        %477 = vmatprep.subr.mxu0 0.0
        %478 = vmatpush1.msra.mxu0 0.0
        %479 = vmatprep.subr.mxu0 0.0
        %480 = vmatpush1.msra.mxu0 0.0
        %481 = vmatprep.subr.mxu0 0.0
        %482 = vmatpush1.msra.mxu0 0.0
        %483 = vmatprep.subr.mxu0 0.0
        %484 = vmatpush1.msra.mxu0 0.0
        %485 = vmatprep.subr.mxu0 0.0
        %486 = vmatpush1.msra.mxu0 0.0
        %487 = vmatprep.subr.mxu0 0.0
        %488 = vmatpush1.msra.mxu0 0.0
        %489 = vmatprep.subr.mxu0 0.0
        %490 = vmatpush1.msra.mxu0 0.0
        %491 = vmatprep.subr.mxu0 0.0
        %492 = vmatpush1.msra.mxu0 0.0
        %493 = vmatprep.subr.mxu0 0.0
        %494 = vmatpush1.msra.mxu0 0.0
        %495 = vmatprep.subr.mxu0 0.0
        %496 = vmatpush1.msra.mxu0 0.0
        %497 = vmatprep.subr.mxu0 0.0
        %498 = vmatpush1.msra.mxu0 0.0
        %499 = vmatprep.subr.mxu0 0.0
        %500 = vmatpush1.msra.mxu0 0.0
        %501 = vmatprep.subr.mxu0 0.0
        %502 = vmatpush1.msra.mxu0 0.0
        %503 = vmatprep.subr.mxu0 0.0
        %504 = vmatpush1.msra.mxu0 0.0
        %505 = vmatprep.mubr.f32.mxu0 0.0
        %506 = vmatmul.mubr.f32.gmra.mrb[0].mxu0 %v434
        %v507 = vpop.f32.mrb[0].mxu0
        %v508 = vadd.f32 0.0, %v507
        %v509 = vpop.f32.mrb[0].mxu0
        %510 = vmatprep.mubr.f32.mxu0 0.0
        %511 = vmatmul.mubr.f32.gmra.mrb[0].mxu0 %v436
        %v512 = vpop.f32.mrb[0].mxu0
        %v513 = vadd.f32 0.0, %v512
        %v514 = vpop.f32.mrb[0].mxu0
        %515 = vdwg.mxu0
        %v516 = vsub.f32 %v422, %v508
        %v517 = vsub.f32 %v427, %v513
        %v518 = vld [vmem:[%s234] sm:$0xf]
        %v520 = vsub.f32 %v518, %v346
        %v521 = vpack.c.bf16 %v520, %v520
        %v522 = vmul.f32 %v518, %v518
        %v523 = vsel %vm352, %v522, 0.0
        %v524 = vrot.slane %v523, 4
        %v525 = vadd.f32 %v523, %v524
        %v526 = vrot.slane %v525, 2
        %v527 = vadd.f32 %v525, %v526
        %v528 = vrot.slane %v527, 1
        %v529 = vadd.f32 %v527, %v528
        %v530 = vrsqrt.pop %v529
        %v531 = vmul.f32 %v529, %v530
        %vm532 = vcmp.eq.f32.partialorder %v529, inf
        %v533 = vsel %vm532, %v529, %v531
        %vm534 = vcmp.eq.f32.partialorder %v529, 0.0
        %v535 = vand.u32 %v529, 2147483648
        %v536 = vsel %vm534, %v535, %v533
        %v537 = vlaneseq
        %v538 = vshrl.u32 %v537, 7
        %v539 = vsub.s32 3, %v538
        %v540 = vrot.slane %v518, %v539
        %v541 = vmul.f32 %v301, %v540
        %v542 = vmul.f32 %v305, %v540
        %v544 = vsel %vm347, %v288, 0
        %vm546 = vcmask 1040384
        %vm547 = vcmask 1041408
        %v548 = vsel %vm546, 4294967295, 65535
        %v549 = vsel %vm547, %v548, 0
        %v551 = vand.u32 %v521, %v549
        %553 = vmatprep.subr.bf16.mxu0 0
        %554 = vmatpush1.bf16.msra.mxu0 %v551
        %555 = vmatprep.subr.bf16.mxu0 0
        %556 = vmatpush1.bf16.msra.mxu0 0
        %557 = vmatprep.subr.bf16.mxu0 0
        %558 = vmatpush1.bf16.msra.mxu0 0
        %559 = vmatprep.subr.bf16.mxu0 0
        %560 = vmatpush1.bf16.msra.mxu0 0
        %561 = vmatprep.subr.bf16.mxu0 0
        %562 = vmatpush1.bf16.msra.mxu0 0
        %563 = vmatprep.subr.bf16.mxu0 0
        %564 = vmatpush1.bf16.msra.mxu0 0
        %565 = vmatprep.subr.bf16.mxu0 0
        %566 = vmatpush1.bf16.msra.mxu0 0
        %567 = vmatprep.subr.bf16.mxu0 0
        %568 = vmatpush1.bf16.msra.mxu0 0
        %569 = vmatprep.subr.bf16.mxu0 0
        %570 = vmatpush1.bf16.msra.mxu0 0
        %571 = vmatprep.subr.bf16.mxu0 0
        %572 = vmatpush1.bf16.msra.mxu0 0
        %573 = vmatprep.subr.bf16.mxu0 0
        %574 = vmatpush1.bf16.msra.mxu0 0
        %575 = vmatprep.subr.bf16.mxu0 0
        %576 = vmatpush1.bf16.msra.mxu0 0
        %577 = vmatprep.subr.bf16.mxu0 0
        %578 = vmatpush1.bf16.msra.mxu0 0
        %579 = vmatprep.subr.bf16.mxu0 0
        %580 = vmatpush1.bf16.msra.mxu0 0
        %581 = vmatprep.subr.bf16.mxu0 0
        %582 = vmatpush1.bf16.msra.mxu0 0
        %583 = vmatprep.subr.bf16.mxu0 0
        %584 = vmatpush1.bf16.msra.mxu0 0
        %585 = vmatprep.mubr.bf16.mxu0 0
        %586 = vmatmul.mubr.bf16.gmra.mrb[0].mxu0 %v544
        %v587 = vpop.f32.mrb[0].mxu0
        %v588 = vadd.f32 %v541, %v587
        %v589 = vpop.f32.mrb[0].mxu0
        %v590 = vpop.f32.mrb[0].mxu0
        %v591 = vadd.f32 %v542, %v590
        %v592 = vpop.f32.mrb[0].mxu0
        %593 = vdwg.mxu0
        %v594 = vmul.f32 %v309, %v536
        %v595 = vmul.f32 %v313, %v536
        %v596 = vadd.f32 %v588, %v594
        %v597 = vadd.f32 %v591, %v595
        %vm598 = vcmp.gt.f32.partialorder %v315, 0.0
        %v599 = vsel %vm598, 1, 0
        %v600 = vcvt.s32.f32 %v599
        %v601 = vadd.f32 %v596, %v516
        %v602 = vadd.f32 %v597, %v517
        %v603 = vlaneseq
        %v604 = vshrl.u32 %v603, 7
        %v605 = vsub.s32 0, %v604
        %v606 = vrot.slane %v600, %v605
        %v607 = vmul.f32 %v601, %v606
        %v608 = vmul.f32 %v602, %v606
        %v609 = vadd.f32 %v607, %v292
        %v610 = vadd.f32 %v608, %v297
        %v611 = vmax.f32 %v609, 0.0
        %v612 = vmax.f32 %v610, 0.0
        %vm613 = vcmask 130048
        %v615 = vsel %vm613, %v284, 0
        %v618 = vsel %vm613, %v285, 0
        %v621 = vsel %vm613, %v286, 0
        %v624 = vsel %vm613, %v287, 0
        %626 = vmatprep.subr.mxu0 0.0
        %627 = vmatpush1.msra.mxu0 %v611
        %628 = vmatprep.subr.mxu0 0.0
        %629 = vmatpush1.msra.mxu0 %v612
        %630 = vmatprep.subr.mxu0 0.0
        %631 = vmatpush1.msra.mxu0 0.0
        %632 = vmatprep.subr.mxu0 0.0
        %633 = vmatpush1.msra.mxu0 0.0
        %634 = vmatprep.subr.mxu0 0.0
        %635 = vmatpush1.msra.mxu0 0.0
        %636 = vmatprep.subr.mxu0 0.0
        %637 = vmatpush1.msra.mxu0 0.0
        %638 = vmatprep.subr.mxu0 0.0
        %639 = vmatpush1.msra.mxu0 0.0
        %640 = vmatprep.subr.mxu0 0.0
        %641 = vmatpush1.msra.mxu0 0.0
        %642 = vmatprep.subr.mxu0 0.0
        %643 = vmatpush1.msra.mxu0 0.0
        %644 = vmatprep.subr.mxu0 0.0
        %645 = vmatpush1.msra.mxu0 0.0
        %646 = vmatprep.subr.mxu0 0.0
        %647 = vmatpush1.msra.mxu0 0.0
        %648 = vmatprep.subr.mxu0 0.0
        %649 = vmatpush1.msra.mxu0 0.0
        %650 = vmatprep.subr.mxu0 0.0
        %651 = vmatpush1.msra.mxu0 0.0
        %652 = vmatprep.subr.mxu0 0.0
        %653 = vmatpush1.msra.mxu0 0.0
        %654 = vmatprep.subr.mxu0 0.0
        %655 = vmatpush1.msra.mxu0 0.0
        %656 = vmatprep.subr.mxu0 0.0
        %657 = vmatpush1.msra.mxu0 0.0
        %658 = vmatprep.subr.mxu0 0.0
        %659 = vmatpush1.msra.mxu0 0.0
        %660 = vmatprep.subr.mxu0 0.0
        %661 = vmatpush1.msra.mxu0 0.0
        %662 = vmatprep.subr.mxu0 0.0
        %663 = vmatpush1.msra.mxu0 0.0
        %664 = vmatprep.subr.mxu0 0.0
        %665 = vmatpush1.msra.mxu0 0.0
        %666 = vmatprep.subr.mxu0 0.0
        %667 = vmatpush1.msra.mxu0 0.0
        %668 = vmatprep.subr.mxu0 0.0
        %669 = vmatpush1.msra.mxu0 0.0
        %670 = vmatprep.subr.mxu0 0.0
        %671 = vmatpush1.msra.mxu0 0.0
        %672 = vmatprep.subr.mxu0 0.0
        %673 = vmatpush1.msra.mxu0 0.0
        %674 = vmatprep.subr.mxu0 0.0
        %675 = vmatpush1.msra.mxu0 0.0
        %676 = vmatprep.subr.mxu0 0.0
        %677 = vmatpush1.msra.mxu0 0.0
        %678 = vmatprep.subr.mxu0 0.0
        %679 = vmatpush1.msra.mxu0 0.0
        %680 = vmatprep.subr.mxu0 0.0
        %681 = vmatpush1.msra.mxu0 0.0
        %682 = vmatprep.subr.mxu0 0.0
        %683 = vmatpush1.msra.mxu0 0.0
        %684 = vmatprep.subr.mxu0 0.0
        %685 = vmatpush1.msra.mxu0 0.0
        %686 = vmatprep.subr.mxu0 0.0
        %687 = vmatpush1.msra.mxu0 0.0
        %688 = vmatprep.subr.mxu0 0.0
        %689 = vmatpush1.msra.mxu0 0.0
        %690 = vmatprep.mubr.f32.mxu0 0.0
        %691 = vmatmul.mubr.f32.gmra.mrb[0].mxu0 %v615
        %v692 = vpop.f32.mrb[0].mxu0
        %v693 = vadd.f32 0.0, %v692
        %v694 = vpop.f32.mrb[0].mxu0
        %695 = vmatprep.mubr.f32.mxu0 0.0
        %696 = vmatmul.mubr.f32.gmra.mrb[0].mxu0 %v618
        %v697 = vpop.f32.mrb[0].mxu0
        %v698 = vadd.f32 0.0, %v697
        %v699 = vpop.f32.mrb[0].mxu0
        %700 = vmatprep.mubr.f32.mxu0 0.0
        %701 = vmatmul.mubr.f32.gmra.mrb[0].mxu0 %v621
        %v702 = vpop.f32.mrb[0].mxu0
        %v703 = vadd.f32 0.0, %v702
        %v704 = vpop.f32.mrb[0].mxu0
        %705 = vmatprep.mubr.f32.mxu0 0.0
        %706 = vmatmul.mubr.f32.gmra.mrb[0].mxu0 %v624
        %v707 = vpop.f32.mrb[0].mxu0
        %v708 = vadd.f32 0.0, %v707
        %v709 = vpop.f32.mrb[0].mxu0
        %710 = vdwg.mxu0
        %v711 = vld [vmem:[%s234 + $0x4] sm:$0xf]
        %v712 = vsub.f32 %v711, %v346
        %v713 = vpack.c.bf16 %v712, %v712
        %v714 = vmul.f32 %v711, %v711
        %v715 = vsel %vm352, %v714, 0.0
        %v716 = vrot.slane %v715, 4
        %v717 = vadd.f32 %v715, %v716
        %v718 = vrot.slane %v717, 2
        %v719 = vadd.f32 %v717, %v718
        %v720 = vrot.slane %v719, 1
        %v721 = vadd.f32 %v719, %v720
        %v722 = vrsqrt.pop %v721
        %v723 = vmul.f32 %v721, %v722
        %vm724 = vcmp.eq.f32.partialorder %v721, inf
        %v725 = vsel %vm724, %v721, %v723
        %vm726 = vcmp.eq.f32.partialorder %v721, 0.0
        %v727 = vand.u32 %v721, 2147483648
        %v728 = vsel %vm726, %v727, %v725
        %v729 = vlaneseq
        %v730 = vshrl.u32 %v729, 7
        %v731 = vsub.s32 3, %v730
        %v732 = vrot.slane %v711, %v731
        %v733 = vmul.f32 %v301, %v732
        %v734 = vmul.f32 %v305, %v732
        %v736 = vand.u32 %v713, %v549
        %738 = vmatprep.subr.bf16.mxu0 0
        %739 = vmatpush1.bf16.msra.mxu0 %v736
        %740 = vmatprep.subr.bf16.mxu0 0
        %741 = vmatpush1.bf16.msra.mxu0 0
        %742 = vmatprep.subr.bf16.mxu0 0
        %743 = vmatpush1.bf16.msra.mxu0 0
        %744 = vmatprep.subr.bf16.mxu0 0
        %745 = vmatpush1.bf16.msra.mxu0 0
        %746 = vmatprep.subr.bf16.mxu0 0
        %747 = vmatpush1.bf16.msra.mxu0 0
        %748 = vmatprep.subr.bf16.mxu0 0
        %749 = vmatpush1.bf16.msra.mxu0 0
        %750 = vmatprep.subr.bf16.mxu0 0
        %751 = vmatpush1.bf16.msra.mxu0 0
        %752 = vmatprep.subr.bf16.mxu0 0
        %753 = vmatpush1.bf16.msra.mxu0 0
        %754 = vmatprep.subr.bf16.mxu0 0
        %755 = vmatpush1.bf16.msra.mxu0 0
        %756 = vmatprep.subr.bf16.mxu0 0
        %757 = vmatpush1.bf16.msra.mxu0 0
        %758 = vmatprep.subr.bf16.mxu0 0
        %759 = vmatpush1.bf16.msra.mxu0 0
        %760 = vmatprep.subr.bf16.mxu0 0
        %761 = vmatpush1.bf16.msra.mxu0 0
        %762 = vmatprep.subr.bf16.mxu0 0
        %763 = vmatpush1.bf16.msra.mxu0 0
        %764 = vmatprep.subr.bf16.mxu0 0
        %765 = vmatpush1.bf16.msra.mxu0 0
        %766 = vmatprep.subr.bf16.mxu0 0
        %767 = vmatpush1.bf16.msra.mxu0 0
        %768 = vmatprep.subr.bf16.mxu0 0
        %769 = vmatpush1.bf16.msra.mxu0 0
        %770 = vmatprep.mubr.bf16.mxu0 0
        %771 = vmatmul.mubr.bf16.gmra.mrb[0].mxu0 %v544
        %v772 = vpop.f32.mrb[0].mxu0
        %v773 = vadd.f32 %v733, %v772
        %v774 = vpop.f32.mrb[0].mxu0
        %v775 = vpop.f32.mrb[0].mxu0
        %v776 = vadd.f32 %v734, %v775
        %v777 = vpop.f32.mrb[0].mxu0
        %778 = vdwg.mxu0
        %v779 = vmul.f32 %v309, %v728
        %v780 = vmul.f32 %v313, %v728
        %v781 = vadd.f32 %v773, %v779
        %v782 = vadd.f32 %v776, %v780
        %vm783 = vcmp.gt.f32.partialorder %v315, 1.0
        %v784 = vsel %vm783, 1, 0
        %v785 = vcvt.s32.f32 %v784
        %v786 = vadd.f32 %v781, %v516
        %v787 = vadd.f32 %v782, %v517
        %v788 = vlaneseq
        %v789 = vshrl.u32 %v788, 7
        %v790 = vsub.s32 0, %v789
        %v791 = vrot.slane %v785, %v790
        %v792 = vmul.f32 %v786, %v791
        %v793 = vmul.f32 %v787, %v791
        %v794 = vadd.f32 %v792, %v292
        %v795 = vadd.f32 %v793, %v297
        %v796 = vmax.f32 %v794, 0.0
        %v797 = vmax.f32 %v795, 0.0
        %798 = vmatprep.subr.mxu0 0.0
        %799 = vmatpush1.msra.mxu0 %v796
        %800 = vmatprep.subr.mxu0 0.0
        %801 = vmatpush1.msra.mxu0 %v797
        %802 = vmatprep.subr.mxu0 0.0
        %803 = vmatpush1.msra.mxu0 0.0
        %804 = vmatprep.subr.mxu0 0.0
        %805 = vmatpush1.msra.mxu0 0.0
        %806 = vmatprep.subr.mxu0 0.0
        %807 = vmatpush1.msra.mxu0 0.0
        %808 = vmatprep.subr.mxu0 0.0
        %809 = vmatpush1.msra.mxu0 0.0
        %810 = vmatprep.subr.mxu0 0.0
        %811 = vmatpush1.msra.mxu0 0.0
        %812 = vmatprep.subr.mxu0 0.0
        %813 = vmatpush1.msra.mxu0 0.0
        %814 = vmatprep.subr.mxu0 0.0
        %815 = vmatpush1.msra.mxu0 0.0
        %816 = vmatprep.subr.mxu0 0.0
        %817 = vmatpush1.msra.mxu0 0.0
        %818 = vmatprep.subr.mxu0 0.0
        %819 = vmatpush1.msra.mxu0 0.0
        %820 = vmatprep.subr.mxu0 0.0
        %821 = vmatpush1.msra.mxu0 0.0
        %822 = vmatprep.subr.mxu0 0.0
        %823 = vmatpush1.msra.mxu0 0.0
        %824 = vmatprep.subr.mxu0 0.0
        %825 = vmatpush1.msra.mxu0 0.0
        %826 = vmatprep.subr.mxu0 0.0
        %827 = vmatpush1.msra.mxu0 0.0
        %828 = vmatprep.subr.mxu0 0.0
        %829 = vmatpush1.msra.mxu0 0.0
        %830 = vmatprep.subr.mxu0 0.0
        %831 = vmatpush1.msra.mxu0 0.0
        %832 = vmatprep.subr.mxu0 0.0
        %833 = vmatpush1.msra.mxu0 0.0
        %834 = vmatprep.subr.mxu0 0.0
        %835 = vmatpush1.msra.mxu0 0.0
        %836 = vmatprep.subr.mxu0 0.0
        %837 = vmatpush1.msra.mxu0 0.0
        %838 = vmatprep.subr.mxu0 0.0
        %839 = vmatpush1.msra.mxu0 0.0
        %840 = vmatprep.subr.mxu0 0.0
        %841 = vmatpush1.msra.mxu0 0.0
        %842 = vmatprep.subr.mxu0 0.0
        %843 = vmatpush1.msra.mxu0 0.0
        %844 = vmatprep.subr.mxu0 0.0
        %845 = vmatpush1.msra.mxu0 0.0
        %846 = vmatprep.subr.mxu0 0.0
        %847 = vmatpush1.msra.mxu0 0.0
        %848 = vmatprep.subr.mxu0 0.0
        %849 = vmatpush1.msra.mxu0 0.0
        %850 = vmatprep.subr.mxu0 0.0
        %851 = vmatpush1.msra.mxu0 0.0
        %852 = vmatprep.subr.mxu0 0.0
        %853 = vmatpush1.msra.mxu0 0.0
        %854 = vmatprep.subr.mxu0 0.0
        %855 = vmatpush1.msra.mxu0 0.0
        %856 = vmatprep.subr.mxu0 0.0
        %857 = vmatpush1.msra.mxu0 0.0
        %858 = vmatprep.subr.mxu0 0.0
        %859 = vmatpush1.msra.mxu0 0.0
        %860 = vmatprep.subr.mxu0 0.0
        %861 = vmatpush1.msra.mxu0 0.0
        %862 = vmatprep.mubr.f32.mxu0 0.0
        %863 = vmatmul.mubr.f32.gmra.mrb[0].mxu0 %v615
        %v864 = vpop.f32.mrb[0].mxu0
        %v865 = vadd.f32 0.0, %v864
        %v866 = vpop.f32.mrb[0].mxu0
        %867 = vmatprep.mubr.f32.mxu0 0.0
        %868 = vmatmul.mubr.f32.gmra.mrb[0].mxu0 %v618
        %v869 = vpop.f32.mrb[0].mxu0
        %v870 = vadd.f32 0.0, %v869
        %v871 = vpop.f32.mrb[0].mxu0
        %872 = vmatprep.mubr.f32.mxu0 0.0
        %873 = vmatmul.mubr.f32.gmra.mrb[0].mxu0 %v621
        %v874 = vpop.f32.mrb[0].mxu0
        %v875 = vadd.f32 0.0, %v874
        %v876 = vpop.f32.mrb[0].mxu0
        %877 = vmatprep.mubr.f32.mxu0 0.0
        %878 = vmatmul.mubr.f32.gmra.mrb[0].mxu0 %v624
        %v879 = vpop.f32.mrb[0].mxu0
        %v880 = vadd.f32 0.0, %v879
        %v881 = vpop.f32.mrb[0].mxu0
        %882 = vdwg.mxu0
        %v883 = vmax.f32 %v611, %v796
        %v884 = vmax.f32 %v612, %v797
        %v885 = vmax.f32 %v693, %v865
        %v886 = vmax.f32 %v698, %v870
        %v887 = vmax.f32 %v703, %v875
        %v888 = vmax.f32 %v708, %v880
        %v889 = vld [vmem:[%s234 + $0x8] sm:$0xf]
        %v890 = vsub.f32 %v889, %v346
        %v891 = vpack.c.bf16 %v890, %v890
        %v892 = vmul.f32 %v889, %v889
        %v893 = vsel %vm352, %v892, 0.0
        %v894 = vrot.slane %v893, 4
        %v895 = vadd.f32 %v893, %v894
        %v896 = vrot.slane %v895, 2
        %v897 = vadd.f32 %v895, %v896
        %v898 = vrot.slane %v897, 1
        %v899 = vadd.f32 %v897, %v898
        %v900 = vrsqrt.pop %v899
        %v901 = vmul.f32 %v899, %v900
        %vm902 = vcmp.eq.f32.partialorder %v899, inf
        %v903 = vsel %vm902, %v899, %v901
        %vm904 = vcmp.eq.f32.partialorder %v899, 0.0
        %v905 = vand.u32 %v899, 2147483648
        %v906 = vsel %vm904, %v905, %v903
        %v907 = vlaneseq
        %v908 = vshrl.u32 %v907, 7
        %v909 = vsub.s32 3, %v908
        %v910 = vrot.slane %v889, %v909
        %v911 = vmul.f32 %v301, %v910
        %v912 = vmul.f32 %v305, %v910
        %v914 = vand.u32 %v891, %v549
        %916 = vmatprep.subr.bf16.mxu0 0
        %917 = vmatpush1.bf16.msra.mxu0 %v914
        %918 = vmatprep.subr.bf16.mxu0 0
        %919 = vmatpush1.bf16.msra.mxu0 0
        %920 = vmatprep.subr.bf16.mxu0 0
        %921 = vmatpush1.bf16.msra.mxu0 0
        %922 = vmatprep.subr.bf16.mxu0 0
        %923 = vmatpush1.bf16.msra.mxu0 0
        %924 = vmatprep.subr.bf16.mxu0 0
        %925 = vmatpush1.bf16.msra.mxu0 0
        %926 = vmatprep.subr.bf16.mxu0 0
        %927 = vmatpush1.bf16.msra.mxu0 0
        %928 = vmatprep.subr.bf16.mxu0 0
        %929 = vmatpush1.bf16.msra.mxu0 0
        %930 = vmatprep.subr.bf16.mxu0 0
        %931 = vmatpush1.bf16.msra.mxu0 0
        %932 = vmatprep.subr.bf16.mxu0 0
        %933 = vmatpush1.bf16.msra.mxu0 0
        %934 = vmatprep.subr.bf16.mxu0 0
        %935 = vmatpush1.bf16.msra.mxu0 0
        %936 = vmatprep.subr.bf16.mxu0 0
        %937 = vmatpush1.bf16.msra.mxu0 0
        %938 = vmatprep.subr.bf16.mxu0 0
        %939 = vmatpush1.bf16.msra.mxu0 0
        %940 = vmatprep.subr.bf16.mxu0 0
        %941 = vmatpush1.bf16.msra.mxu0 0
        %942 = vmatprep.subr.bf16.mxu0 0
        %943 = vmatpush1.bf16.msra.mxu0 0
        %944 = vmatprep.subr.bf16.mxu0 0
        %945 = vmatpush1.bf16.msra.mxu0 0
        %946 = vmatprep.subr.bf16.mxu0 0
        %947 = vmatpush1.bf16.msra.mxu0 0
        %948 = vmatprep.mubr.bf16.mxu0 0
        %949 = vmatmul.mubr.bf16.gmra.mrb[0].mxu0 %v544
        %v950 = vpop.f32.mrb[0].mxu0
        %v951 = vadd.f32 %v911, %v950
        %v952 = vpop.f32.mrb[0].mxu0
        %v953 = vpop.f32.mrb[0].mxu0
        %v954 = vadd.f32 %v912, %v953
        %v955 = vpop.f32.mrb[0].mxu0
        %956 = vdwg.mxu0
        %v957 = vmul.f32 %v309, %v906
        %v958 = vmul.f32 %v313, %v906
        %v959 = vadd.f32 %v951, %v957
        %v960 = vadd.f32 %v954, %v958
        %vm961 = vcmp.gt.f32.partialorder %v315, 2.0
        %v962 = vsel %vm961, 1, 0
        %v963 = vcvt.s32.f32 %v962
        %v964 = vadd.f32 %v959, %v516
        %v965 = vadd.f32 %v960, %v517
        %v966 = vlaneseq
        %v967 = vshrl.u32 %v966, 7
        %v968 = vsub.s32 0, %v967
        %v969 = vrot.slane %v963, %v968
        %v970 = vmul.f32 %v964, %v969
        %v971 = vmul.f32 %v965, %v969
        %v972 = vadd.f32 %v970, %v292
        %v973 = vadd.f32 %v971, %v297
        %v974 = vmax.f32 %v972, 0.0
        %v975 = vmax.f32 %v973, 0.0
        %976 = vmatprep.subr.mxu0 0.0
        %977 = vmatpush1.msra.mxu0 %v974
        %978 = vmatprep.subr.mxu0 0.0
        %979 = vmatpush1.msra.mxu0 %v975
        %980 = vmatprep.subr.mxu0 0.0
        %981 = vmatpush1.msra.mxu0 0.0
        %982 = vmatprep.subr.mxu0 0.0
        %983 = vmatpush1.msra.mxu0 0.0
        %984 = vmatprep.subr.mxu0 0.0
        %985 = vmatpush1.msra.mxu0 0.0
        %986 = vmatprep.subr.mxu0 0.0
        %987 = vmatpush1.msra.mxu0 0.0
        %988 = vmatprep.subr.mxu0 0.0
        %989 = vmatpush1.msra.mxu0 0.0
        %990 = vmatprep.subr.mxu0 0.0
        %991 = vmatpush1.msra.mxu0 0.0
        %992 = vmatprep.subr.mxu0 0.0
        %993 = vmatpush1.msra.mxu0 0.0
        %994 = vmatprep.subr.mxu0 0.0
        %995 = vmatpush1.msra.mxu0 0.0
        %996 = vmatprep.subr.mxu0 0.0
        %997 = vmatpush1.msra.mxu0 0.0
        %998 = vmatprep.subr.mxu0 0.0
        %999 = vmatpush1.msra.mxu0 0.0
        %1000 = vmatprep.subr.mxu0 0.0
        %1001 = vmatpush1.msra.mxu0 0.0
        %1002 = vmatprep.subr.mxu0 0.0
        %1003 = vmatpush1.msra.mxu0 0.0
        %1004 = vmatprep.subr.mxu0 0.0
        %1005 = vmatpush1.msra.mxu0 0.0
        %1006 = vmatprep.subr.mxu0 0.0
        %1007 = vmatpush1.msra.mxu0 0.0
        %1008 = vmatprep.subr.mxu0 0.0
        %1009 = vmatpush1.msra.mxu0 0.0
        %1010 = vmatprep.subr.mxu0 0.0
        %1011 = vmatpush1.msra.mxu0 0.0
        %1012 = vmatprep.subr.mxu0 0.0
        %1013 = vmatpush1.msra.mxu0 0.0
        %1014 = vmatprep.subr.mxu0 0.0
        %1015 = vmatpush1.msra.mxu0 0.0
        %1016 = vmatprep.subr.mxu0 0.0
        %1017 = vmatpush1.msra.mxu0 0.0
        %1018 = vmatprep.subr.mxu0 0.0
        %1019 = vmatpush1.msra.mxu0 0.0
        %1020 = vmatprep.subr.mxu0 0.0
        %1021 = vmatpush1.msra.mxu0 0.0
        %1022 = vmatprep.subr.mxu0 0.0
        %1023 = vmatpush1.msra.mxu0 0.0
        %1024 = vmatprep.subr.mxu0 0.0
        %1025 = vmatpush1.msra.mxu0 0.0
        %1026 = vmatprep.subr.mxu0 0.0
        %1027 = vmatpush1.msra.mxu0 0.0
        %1028 = vmatprep.subr.mxu0 0.0
        %1029 = vmatpush1.msra.mxu0 0.0
        %1030 = vmatprep.subr.mxu0 0.0
        %1031 = vmatpush1.msra.mxu0 0.0
        %1032 = vmatprep.subr.mxu0 0.0
        %1033 = vmatpush1.msra.mxu0 0.0
        %1034 = vmatprep.subr.mxu0 0.0
        %1035 = vmatpush1.msra.mxu0 0.0
        %1036 = vmatprep.subr.mxu0 0.0
        %1037 = vmatpush1.msra.mxu0 0.0
        %1038 = vmatprep.subr.mxu0 0.0
        %1039 = vmatpush1.msra.mxu0 0.0
        %1040 = vmatprep.mubr.f32.mxu0 0.0
        %1041 = vmatmul.mubr.f32.gmra.mrb[0].mxu0 %v615
        %v1042 = vpop.f32.mrb[0].mxu0
        %v1043 = vadd.f32 0.0, %v1042
        %v1044 = vpop.f32.mrb[0].mxu0
        %1045 = vmatprep.mubr.f32.mxu0 0.0
        %1046 = vmatmul.mubr.f32.gmra.mrb[0].mxu0 %v618
        %v1047 = vpop.f32.mrb[0].mxu0
        %v1048 = vadd.f32 0.0, %v1047
        %v1049 = vpop.f32.mrb[0].mxu0
        %1050 = vmatprep.mubr.f32.mxu0 0.0
        %1051 = vmatmul.mubr.f32.gmra.mrb[0].mxu0 %v621
        %v1052 = vpop.f32.mrb[0].mxu0
        %v1053 = vadd.f32 0.0, %v1052
        %v1054 = vpop.f32.mrb[0].mxu0
        %1055 = vmatprep.mubr.f32.mxu0 0.0
        %1056 = vmatmul.mubr.f32.gmra.mrb[0].mxu0 %v624
        %v1057 = vpop.f32.mrb[0].mxu0
        %v1058 = vadd.f32 0.0, %v1057
        %v1059 = vpop.f32.mrb[0].mxu0
        %1060 = vdwg.mxu0
        %v1061 = vmax.f32 %v883, %v974
        %v1062 = vmax.f32 %v884, %v975
        %v1063 = vmax.f32 %v885, %v1043
        %v1064 = vmax.f32 %v886, %v1048
        %v1065 = vmax.f32 %v887, %v1053
        %v1066 = vmax.f32 %v888, %v1058
        %v1067 = vld [vmem:[%s234 + $0xc] sm:$0xf]
        %v1068 = vsub.f32 %v1067, %v346
        %v1069 = vpack.c.bf16 %v1068, %v1068
        %v1070 = vmul.f32 %v1067, %v1067
        %v1071 = vsel %vm352, %v1070, 0.0
        %v1072 = vrot.slane %v1071, 4
        %v1073 = vadd.f32 %v1071, %v1072
        %v1074 = vrot.slane %v1073, 2
        %v1075 = vadd.f32 %v1073, %v1074
        %v1076 = vrot.slane %v1075, 1
        %v1077 = vadd.f32 %v1075, %v1076
        %v1078 = vrsqrt.pop %v1077
        %v1079 = vmul.f32 %v1077, %v1078
        %vm1080 = vcmp.eq.f32.partialorder %v1077, inf
        %v1081 = vsel %vm1080, %v1077, %v1079
        %vm1082 = vcmp.eq.f32.partialorder %v1077, 0.0
        %v1083 = vand.u32 %v1077, 2147483648
        %v1084 = vsel %vm1082, %v1083, %v1081
        %v1085 = vlaneseq
        %v1086 = vshrl.u32 %v1085, 7
        %v1087 = vsub.s32 3, %v1086
        %v1088 = vrot.slane %v1067, %v1087
        %v1089 = vmul.f32 %v301, %v1088
        %v1090 = vmul.f32 %v305, %v1088
        %v1092 = vand.u32 %v1069, %v549
        %1094 = vmatprep.subr.bf16.mxu0 0
        %1095 = vmatpush1.bf16.msra.mxu0 %v1092
        %1096 = vmatprep.subr.bf16.mxu0 0
        %1097 = vmatpush1.bf16.msra.mxu0 0
        %1098 = vmatprep.subr.bf16.mxu0 0
        %1099 = vmatpush1.bf16.msra.mxu0 0
        %1100 = vmatprep.subr.bf16.mxu0 0
        %1101 = vmatpush1.bf16.msra.mxu0 0
        %1102 = vmatprep.subr.bf16.mxu0 0
        %1103 = vmatpush1.bf16.msra.mxu0 0
        %1104 = vmatprep.subr.bf16.mxu0 0
        %1105 = vmatpush1.bf16.msra.mxu0 0
        %1106 = vmatprep.subr.bf16.mxu0 0
        %1107 = vmatpush1.bf16.msra.mxu0 0
        %1108 = vmatprep.subr.bf16.mxu0 0
        %1109 = vmatpush1.bf16.msra.mxu0 0
        %1110 = vmatprep.subr.bf16.mxu0 0
        %1111 = vmatpush1.bf16.msra.mxu0 0
        %1112 = vmatprep.subr.bf16.mxu0 0
        %1113 = vmatpush1.bf16.msra.mxu0 0
        %1114 = vmatprep.subr.bf16.mxu0 0
        %1115 = vmatpush1.bf16.msra.mxu0 0
        %1116 = vmatprep.subr.bf16.mxu0 0
        %1117 = vmatpush1.bf16.msra.mxu0 0
        %1118 = vmatprep.subr.bf16.mxu0 0
        %1119 = vmatpush1.bf16.msra.mxu0 0
        %1120 = vmatprep.subr.bf16.mxu0 0
        %1121 = vmatpush1.bf16.msra.mxu0 0
        %1122 = vmatprep.subr.bf16.mxu0 0
        %1123 = vmatpush1.bf16.msra.mxu0 0
        %1124 = vmatprep.subr.bf16.mxu0 0
        %1125 = vmatpush1.bf16.msra.mxu0 0
        %1126 = vmatprep.mubr.bf16.mxu0 0
        %1127 = vmatmul.mubr.bf16.gmra.mrb[0].mxu0 %v544
        %v1128 = vpop.f32.mrb[0].mxu0
        %v1129 = vadd.f32 %v1089, %v1128
        %v1130 = vpop.f32.mrb[0].mxu0
        %v1131 = vpop.f32.mrb[0].mxu0
        %v1132 = vadd.f32 %v1090, %v1131
        %v1133 = vpop.f32.mrb[0].mxu0
        %1134 = vdwg.mxu0
        %v1135 = vmul.f32 %v309, %v1084
        %v1136 = vmul.f32 %v313, %v1084
        %v1137 = vadd.f32 %v1129, %v1135
        %v1138 = vadd.f32 %v1132, %v1136
        %vm1139 = vcmp.gt.f32.partialorder %v315, 3.0
        %v1140 = vsel %vm1139, 1, 0
        %v1141 = vcvt.s32.f32 %v1140
        %v1142 = vadd.f32 %v1137, %v516
        %v1143 = vadd.f32 %v1138, %v517
        %v1144 = vlaneseq
        %v1145 = vshrl.u32 %v1144, 7
        %v1146 = vsub.s32 0, %v1145
        %v1147 = vrot.slane %v1141, %v1146
        %v1148 = vmul.f32 %v1142, %v1147
        %v1149 = vmul.f32 %v1143, %v1147
        %v1150 = vadd.f32 %v1148, %v292
        %v1151 = vadd.f32 %v1149, %v297
        %v1152 = vmax.f32 %v1150, 0.0
        %v1153 = vmax.f32 %v1151, 0.0
        %1154 = vmatprep.subr.mxu0 0.0
        %1155 = vmatpush1.msra.mxu0 %v1152
        %1156 = vmatprep.subr.mxu0 0.0
        %1157 = vmatpush1.msra.mxu0 %v1153
        %1158 = vmatprep.subr.mxu0 0.0
        %1159 = vmatpush1.msra.mxu0 0.0
        %1160 = vmatprep.subr.mxu0 0.0
        %1161 = vmatpush1.msra.mxu0 0.0
        %1162 = vmatprep.subr.mxu0 0.0
        %1163 = vmatpush1.msra.mxu0 0.0
        %1164 = vmatprep.subr.mxu0 0.0
        %1165 = vmatpush1.msra.mxu0 0.0
        %1166 = vmatprep.subr.mxu0 0.0
        %1167 = vmatpush1.msra.mxu0 0.0
        %1168 = vmatprep.subr.mxu0 0.0
        %1169 = vmatpush1.msra.mxu0 0.0
        %1170 = vmatprep.subr.mxu0 0.0
        %1171 = vmatpush1.msra.mxu0 0.0
        %1172 = vmatprep.subr.mxu0 0.0
        %1173 = vmatpush1.msra.mxu0 0.0
        %1174 = vmatprep.subr.mxu0 0.0
        %1175 = vmatpush1.msra.mxu0 0.0
        %1176 = vmatprep.subr.mxu0 0.0
        %1177 = vmatpush1.msra.mxu0 0.0
        %1178 = vmatprep.subr.mxu0 0.0
        %1179 = vmatpush1.msra.mxu0 0.0
        %1180 = vmatprep.subr.mxu0 0.0
        %1181 = vmatpush1.msra.mxu0 0.0
        %1182 = vmatprep.subr.mxu0 0.0
        %1183 = vmatpush1.msra.mxu0 0.0
        %1184 = vmatprep.subr.mxu0 0.0
        %1185 = vmatpush1.msra.mxu0 0.0
        %1186 = vmatprep.subr.mxu0 0.0
        %1187 = vmatpush1.msra.mxu0 0.0
        %1188 = vmatprep.subr.mxu0 0.0
        %1189 = vmatpush1.msra.mxu0 0.0
        %1190 = vmatprep.subr.mxu0 0.0
        %1191 = vmatpush1.msra.mxu0 0.0
        %1192 = vmatprep.subr.mxu0 0.0
        %1193 = vmatpush1.msra.mxu0 0.0
        %1194 = vmatprep.subr.mxu0 0.0
        %1195 = vmatpush1.msra.mxu0 0.0
        %1196 = vmatprep.subr.mxu0 0.0
        %1197 = vmatpush1.msra.mxu0 0.0
        %1198 = vmatprep.subr.mxu0 0.0
        %1199 = vmatpush1.msra.mxu0 0.0
        %1200 = vmatprep.subr.mxu0 0.0
        %1201 = vmatpush1.msra.mxu0 0.0
        %1202 = vmatprep.subr.mxu0 0.0
        %1203 = vmatpush1.msra.mxu0 0.0
        %1204 = vmatprep.subr.mxu0 0.0
        %1205 = vmatpush1.msra.mxu0 0.0
        %1206 = vmatprep.subr.mxu0 0.0
        %1207 = vmatpush1.msra.mxu0 0.0
        %1208 = vmatprep.subr.mxu0 0.0
        %1209 = vmatpush1.msra.mxu0 0.0
        %1210 = vmatprep.subr.mxu0 0.0
        %1211 = vmatpush1.msra.mxu0 0.0
        %1212 = vmatprep.subr.mxu0 0.0
        %1213 = vmatpush1.msra.mxu0 0.0
        %1214 = vmatprep.subr.mxu0 0.0
        %1215 = vmatpush1.msra.mxu0 0.0
        %1216 = vmatprep.subr.mxu0 0.0
        %1217 = vmatpush1.msra.mxu0 0.0
        %1218 = vmatprep.mubr.f32.mxu0 0.0
        %1219 = vmatmul.mubr.f32.gmra.mrb[0].mxu0 %v615
        %v1220 = vpop.f32.mrb[0].mxu0
        %v1221 = vadd.f32 0.0, %v1220
        %v1222 = vpop.f32.mrb[0].mxu0
        %1223 = vmatprep.mubr.f32.mxu0 0.0
        %1224 = vmatmul.mubr.f32.gmra.mrb[0].mxu0 %v618
        %v1225 = vpop.f32.mrb[0].mxu0
        %v1226 = vadd.f32 0.0, %v1225
        %v1227 = vpop.f32.mrb[0].mxu0
        %1228 = vmatprep.mubr.f32.mxu0 0.0
        %1229 = vmatmul.mubr.f32.gmra.mrb[0].mxu0 %v621
        %v1230 = vpop.f32.mrb[0].mxu0
        %v1231 = vadd.f32 0.0, %v1230
        %v1232 = vpop.f32.mrb[0].mxu0
        %1233 = vmatprep.mubr.f32.mxu0 0.0
        %1234 = vmatmul.mubr.f32.gmra.mrb[0].mxu0 %v624
        %v1235 = vpop.f32.mrb[0].mxu0
        %v1236 = vadd.f32 0.0, %v1235
        %v1237 = vpop.f32.mrb[0].mxu0
        %1238 = vdwg.mxu0
        %v1239 = vmax.f32 %v1061, %v1152
        %v1240 = vmax.f32 %v1062, %v1153
        %v1241 = vmax.f32 %v1063, %v1221
        %v1242 = vmax.f32 %v1064, %v1226
        %v1243 = vmax.f32 %v1065, %v1231
        %v1244 = vmax.f32 %v1066, %v1236
        %v1245 = vld [vmem:[%s234 + $0x10] sm:$0xf]
        %v1246 = vsub.f32 %v1245, %v346
        %v1247 = vpack.c.bf16 %v1246, %v1246
        %v1248 = vmul.f32 %v1245, %v1245
        %v1249 = vsel %vm352, %v1248, 0.0
        %v1250 = vrot.slane %v1249, 4
        %v1251 = vadd.f32 %v1249, %v1250
        %v1252 = vrot.slane %v1251, 2
        %v1253 = vadd.f32 %v1251, %v1252
        %v1254 = vrot.slane %v1253, 1
        %v1255 = vadd.f32 %v1253, %v1254
        %v1256 = vrsqrt.pop %v1255
        %v1257 = vmul.f32 %v1255, %v1256
        %vm1258 = vcmp.eq.f32.partialorder %v1255, inf
        %v1259 = vsel %vm1258, %v1255, %v1257
        %vm1260 = vcmp.eq.f32.partialorder %v1255, 0.0
        %v1261 = vand.u32 %v1255, 2147483648
        %v1262 = vsel %vm1260, %v1261, %v1259
        %v1263 = vlaneseq
        %v1264 = vshrl.u32 %v1263, 7
        %v1265 = vsub.s32 3, %v1264
        %v1266 = vrot.slane %v1245, %v1265
        %v1267 = vmul.f32 %v301, %v1266
        %v1268 = vmul.f32 %v305, %v1266
        %v1270 = vand.u32 %v1247, %v549
        %1272 = vmatprep.subr.bf16.mxu0 0
        %1273 = vmatpush1.bf16.msra.mxu0 %v1270
        %1274 = vmatprep.subr.bf16.mxu0 0
        %1275 = vmatpush1.bf16.msra.mxu0 0
        %1276 = vmatprep.subr.bf16.mxu0 0
        %1277 = vmatpush1.bf16.msra.mxu0 0
        %1278 = vmatprep.subr.bf16.mxu0 0
        %1279 = vmatpush1.bf16.msra.mxu0 0
        %1280 = vmatprep.subr.bf16.mxu0 0
        %1281 = vmatpush1.bf16.msra.mxu0 0
        %1282 = vmatprep.subr.bf16.mxu0 0
        %1283 = vmatpush1.bf16.msra.mxu0 0
        %1284 = vmatprep.subr.bf16.mxu0 0
        %1285 = vmatpush1.bf16.msra.mxu0 0
        %1286 = vmatprep.subr.bf16.mxu0 0
        %1287 = vmatpush1.bf16.msra.mxu0 0
        %1288 = vmatprep.subr.bf16.mxu0 0
        %1289 = vmatpush1.bf16.msra.mxu0 0
        %1290 = vmatprep.subr.bf16.mxu0 0
        %1291 = vmatpush1.bf16.msra.mxu0 0
        %1292 = vmatprep.subr.bf16.mxu0 0
        %1293 = vmatpush1.bf16.msra.mxu0 0
        %1294 = vmatprep.subr.bf16.mxu0 0
        %1295 = vmatpush1.bf16.msra.mxu0 0
        %1296 = vmatprep.subr.bf16.mxu0 0
        %1297 = vmatpush1.bf16.msra.mxu0 0
        %1298 = vmatprep.subr.bf16.mxu0 0
        %1299 = vmatpush1.bf16.msra.mxu0 0
        %1300 = vmatprep.subr.bf16.mxu0 0
        %1301 = vmatpush1.bf16.msra.mxu0 0
        %1302 = vmatprep.subr.bf16.mxu0 0
        %1303 = vmatpush1.bf16.msra.mxu0 0
        %1304 = vmatprep.mubr.bf16.mxu0 0
        %1305 = vmatmul.mubr.bf16.gmra.mrb[0].mxu0 %v544
        %v1306 = vpop.f32.mrb[0].mxu0
        %v1307 = vadd.f32 %v1267, %v1306
        %v1308 = vpop.f32.mrb[0].mxu0
        %v1309 = vpop.f32.mrb[0].mxu0
        %v1310 = vadd.f32 %v1268, %v1309
        %v1311 = vpop.f32.mrb[0].mxu0
        %1312 = vdwg.mxu0
        %v1313 = vmul.f32 %v309, %v1262
        %v1314 = vmul.f32 %v313, %v1262
        %v1315 = vadd.f32 %v1307, %v1313
        %v1316 = vadd.f32 %v1310, %v1314
        %vm1317 = vcmp.gt.f32.partialorder %v315, 4.0
        %v1318 = vsel %vm1317, 1, 0
        %v1319 = vcvt.s32.f32 %v1318
        %v1320 = vadd.f32 %v1315, %v516
        %v1321 = vadd.f32 %v1316, %v517
        %v1322 = vlaneseq
        %v1323 = vshrl.u32 %v1322, 7
        %v1324 = vsub.s32 0, %v1323
        %v1325 = vrot.slane %v1319, %v1324
        %v1326 = vmul.f32 %v1320, %v1325
        %v1327 = vmul.f32 %v1321, %v1325
        %v1328 = vadd.f32 %v1326, %v292
        %v1329 = vadd.f32 %v1327, %v297
        %v1330 = vmax.f32 %v1328, 0.0
        %v1331 = vmax.f32 %v1329, 0.0
        %1332 = vmatprep.subr.mxu0 0.0
        %1333 = vmatpush1.msra.mxu0 %v1330
        %1334 = vmatprep.subr.mxu0 0.0
        %1335 = vmatpush1.msra.mxu0 %v1331
        %1336 = vmatprep.subr.mxu0 0.0
        %1337 = vmatpush1.msra.mxu0 0.0
        %1338 = vmatprep.subr.mxu0 0.0
        %1339 = vmatpush1.msra.mxu0 0.0
        %1340 = vmatprep.subr.mxu0 0.0
        %1341 = vmatpush1.msra.mxu0 0.0
        %1342 = vmatprep.subr.mxu0 0.0
        %1343 = vmatpush1.msra.mxu0 0.0
        %1344 = vmatprep.subr.mxu0 0.0
        %1345 = vmatpush1.msra.mxu0 0.0
        %1346 = vmatprep.subr.mxu0 0.0
        %1347 = vmatpush1.msra.mxu0 0.0
        %1348 = vmatprep.subr.mxu0 0.0
        %1349 = vmatpush1.msra.mxu0 0.0
        %1350 = vmatprep.subr.mxu0 0.0
        %1351 = vmatpush1.msra.mxu0 0.0
        %1352 = vmatprep.subr.mxu0 0.0
        %1353 = vmatpush1.msra.mxu0 0.0
        %1354 = vmatprep.subr.mxu0 0.0
        %1355 = vmatpush1.msra.mxu0 0.0
        %1356 = vmatprep.subr.mxu0 0.0
        %1357 = vmatpush1.msra.mxu0 0.0
        %1358 = vmatprep.subr.mxu0 0.0
        %1359 = vmatpush1.msra.mxu0 0.0
        %1360 = vmatprep.subr.mxu0 0.0
        %1361 = vmatpush1.msra.mxu0 0.0
        %1362 = vmatprep.subr.mxu0 0.0
        %1363 = vmatpush1.msra.mxu0 0.0
        %1364 = vmatprep.subr.mxu0 0.0
        %1365 = vmatpush1.msra.mxu0 0.0
        %1366 = vmatprep.subr.mxu0 0.0
        %1367 = vmatpush1.msra.mxu0 0.0
        %1368 = vmatprep.subr.mxu0 0.0
        %1369 = vmatpush1.msra.mxu0 0.0
        %1370 = vmatprep.subr.mxu0 0.0
        %1371 = vmatpush1.msra.mxu0 0.0
        %1372 = vmatprep.subr.mxu0 0.0
        %1373 = vmatpush1.msra.mxu0 0.0
        %1374 = vmatprep.subr.mxu0 0.0
        %1375 = vmatpush1.msra.mxu0 0.0
        %1376 = vmatprep.subr.mxu0 0.0
        %1377 = vmatpush1.msra.mxu0 0.0
        %1378 = vmatprep.subr.mxu0 0.0
        %1379 = vmatpush1.msra.mxu0 0.0
        %1380 = vmatprep.subr.mxu0 0.0
        %1381 = vmatpush1.msra.mxu0 0.0
        %1382 = vmatprep.subr.mxu0 0.0
        %1383 = vmatpush1.msra.mxu0 0.0
        %1384 = vmatprep.subr.mxu0 0.0
        %1385 = vmatpush1.msra.mxu0 0.0
        %1386 = vmatprep.subr.mxu0 0.0
        %1387 = vmatpush1.msra.mxu0 0.0
        %1388 = vmatprep.subr.mxu0 0.0
        %1389 = vmatpush1.msra.mxu0 0.0
        %1390 = vmatprep.subr.mxu0 0.0
        %1391 = vmatpush1.msra.mxu0 0.0
        %1392 = vmatprep.subr.mxu0 0.0
        %1393 = vmatpush1.msra.mxu0 0.0
        %1394 = vmatprep.subr.mxu0 0.0
        %1395 = vmatpush1.msra.mxu0 0.0
        %1396 = vmatprep.mubr.f32.mxu0 0.0
        %1397 = vmatmul.mubr.f32.gmra.mrb[0].mxu0 %v615
        %v1398 = vpop.f32.mrb[0].mxu0
        %v1399 = vadd.f32 0.0, %v1398
        %v1400 = vpop.f32.mrb[0].mxu0
        %1401 = vmatprep.mubr.f32.mxu0 0.0
        %1402 = vmatmul.mubr.f32.gmra.mrb[0].mxu0 %v618
        %v1403 = vpop.f32.mrb[0].mxu0
        %v1404 = vadd.f32 0.0, %v1403
        %v1405 = vpop.f32.mrb[0].mxu0
        %1406 = vmatprep.mubr.f32.mxu0 0.0
        %1407 = vmatmul.mubr.f32.gmra.mrb[0].mxu0 %v621
        %v1408 = vpop.f32.mrb[0].mxu0
        %v1409 = vadd.f32 0.0, %v1408
        %v1410 = vpop.f32.mrb[0].mxu0
        %1411 = vmatprep.mubr.f32.mxu0 0.0
        %1412 = vmatmul.mubr.f32.gmra.mrb[0].mxu0 %v624
        %v1413 = vpop.f32.mrb[0].mxu0
        %v1414 = vadd.f32 0.0, %v1413
        %v1415 = vpop.f32.mrb[0].mxu0
        %1416 = vdwg.mxu0
        %v1417 = vmax.f32 %v1239, %v1330
        %v1418 = vmax.f32 %v1240, %v1331
        %v1419 = vmax.f32 %v1241, %v1399
        %v1420 = vmax.f32 %v1242, %v1404
        %v1421 = vmax.f32 %v1243, %v1409
        %v1422 = vmax.f32 %v1244, %v1414
        %v1423 = vld [vmem:[%s234 + $0x14] sm:$0xf]
        %v1424 = vsub.f32 %v1423, %v346
        %v1425 = vpack.c.bf16 %v1424, %v1424
        %v1426 = vmul.f32 %v1423, %v1423
        %v1427 = vsel %vm352, %v1426, 0.0
        %v1428 = vrot.slane %v1427, 4
        %v1429 = vadd.f32 %v1427, %v1428
        %v1430 = vrot.slane %v1429, 2
        %v1431 = vadd.f32 %v1429, %v1430
        %v1432 = vrot.slane %v1431, 1
        %v1433 = vadd.f32 %v1431, %v1432
        %v1434 = vrsqrt.pop %v1433
        %v1435 = vmul.f32 %v1433, %v1434
        %vm1436 = vcmp.eq.f32.partialorder %v1433, inf
        %v1437 = vsel %vm1436, %v1433, %v1435
        %vm1438 = vcmp.eq.f32.partialorder %v1433, 0.0
        %v1439 = vand.u32 %v1433, 2147483648
        %v1440 = vsel %vm1438, %v1439, %v1437
        %v1441 = vlaneseq
        %v1442 = vshrl.u32 %v1441, 7
        %v1443 = vsub.s32 3, %v1442
        %v1444 = vrot.slane %v1423, %v1443
        %v1445 = vmul.f32 %v301, %v1444
        %v1446 = vmul.f32 %v305, %v1444
        %v1448 = vand.u32 %v1425, %v549
        %1450 = vmatprep.subr.bf16.mxu0 0
        %1451 = vmatpush1.bf16.msra.mxu0 %v1448
        %1452 = vmatprep.subr.bf16.mxu0 0
        %1453 = vmatpush1.bf16.msra.mxu0 0
        %1454 = vmatprep.subr.bf16.mxu0 0
        %1455 = vmatpush1.bf16.msra.mxu0 0
        %1456 = vmatprep.subr.bf16.mxu0 0
        %1457 = vmatpush1.bf16.msra.mxu0 0
        %1458 = vmatprep.subr.bf16.mxu0 0
        %1459 = vmatpush1.bf16.msra.mxu0 0
        %1460 = vmatprep.subr.bf16.mxu0 0
        %1461 = vmatpush1.bf16.msra.mxu0 0
        %1462 = vmatprep.subr.bf16.mxu0 0
        %1463 = vmatpush1.bf16.msra.mxu0 0
        %1464 = vmatprep.subr.bf16.mxu0 0
        %1465 = vmatpush1.bf16.msra.mxu0 0
        %1466 = vmatprep.subr.bf16.mxu0 0
        %1467 = vmatpush1.bf16.msra.mxu0 0
        %1468 = vmatprep.subr.bf16.mxu0 0
        %1469 = vmatpush1.bf16.msra.mxu0 0
        %1470 = vmatprep.subr.bf16.mxu0 0
        %1471 = vmatpush1.bf16.msra.mxu0 0
        %1472 = vmatprep.subr.bf16.mxu0 0
        %1473 = vmatpush1.bf16.msra.mxu0 0
        %1474 = vmatprep.subr.bf16.mxu0 0
        %1475 = vmatpush1.bf16.msra.mxu0 0
        %1476 = vmatprep.subr.bf16.mxu0 0
        %1477 = vmatpush1.bf16.msra.mxu0 0
        %1478 = vmatprep.subr.bf16.mxu0 0
        %1479 = vmatpush1.bf16.msra.mxu0 0
        %1480 = vmatprep.subr.bf16.mxu0 0
        %1481 = vmatpush1.bf16.msra.mxu0 0
        %1482 = vmatprep.mubr.bf16.mxu0 0
        %1483 = vmatmul.mubr.bf16.gmra.mrb[0].mxu0 %v544
        %v1484 = vpop.f32.mrb[0].mxu0
        %v1485 = vadd.f32 %v1445, %v1484
        %v1486 = vpop.f32.mrb[0].mxu0
        %v1487 = vpop.f32.mrb[0].mxu0
        %v1488 = vadd.f32 %v1446, %v1487
        %v1489 = vpop.f32.mrb[0].mxu0
        %1490 = vdwg.mxu0
        %v1491 = vmul.f32 %v309, %v1440
        %v1492 = vmul.f32 %v313, %v1440
        %v1493 = vadd.f32 %v1485, %v1491
        %v1494 = vadd.f32 %v1488, %v1492
        %vm1495 = vcmp.gt.f32.partialorder %v315, 5.0
        %v1496 = vsel %vm1495, 1, 0
        %v1497 = vcvt.s32.f32 %v1496
        %v1498 = vadd.f32 %v1493, %v516
        %v1499 = vadd.f32 %v1494, %v517
        %v1500 = vlaneseq
        %v1501 = vshrl.u32 %v1500, 7
        %v1502 = vsub.s32 0, %v1501
        %v1503 = vrot.slane %v1497, %v1502
        %v1504 = vmul.f32 %v1498, %v1503
        %v1505 = vmul.f32 %v1499, %v1503
        %v1506 = vadd.f32 %v1504, %v292
        %v1507 = vadd.f32 %v1505, %v297
        %v1508 = vmax.f32 %v1506, 0.0
        %v1509 = vmax.f32 %v1507, 0.0
        %1510 = vmatprep.subr.mxu0 0.0
        %1511 = vmatpush1.msra.mxu0 %v1508
        %1512 = vmatprep.subr.mxu0 0.0
        %1513 = vmatpush1.msra.mxu0 %v1509
        %1514 = vmatprep.subr.mxu0 0.0
        %1515 = vmatpush1.msra.mxu0 0.0
        %1516 = vmatprep.subr.mxu0 0.0
        %1517 = vmatpush1.msra.mxu0 0.0
        %1518 = vmatprep.subr.mxu0 0.0
        %1519 = vmatpush1.msra.mxu0 0.0
        %1520 = vmatprep.subr.mxu0 0.0
        %1521 = vmatpush1.msra.mxu0 0.0
        %1522 = vmatprep.subr.mxu0 0.0
        %1523 = vmatpush1.msra.mxu0 0.0
        %1524 = vmatprep.subr.mxu0 0.0
        %1525 = vmatpush1.msra.mxu0 0.0
        %1526 = vmatprep.subr.mxu0 0.0
        %1527 = vmatpush1.msra.mxu0 0.0
        %1528 = vmatprep.subr.mxu0 0.0
        %1529 = vmatpush1.msra.mxu0 0.0
        %1530 = vmatprep.subr.mxu0 0.0
        %1531 = vmatpush1.msra.mxu0 0.0
        %1532 = vmatprep.subr.mxu0 0.0
        %1533 = vmatpush1.msra.mxu0 0.0
        %1534 = vmatprep.subr.mxu0 0.0
        %1535 = vmatpush1.msra.mxu0 0.0
        %1536 = vmatprep.subr.mxu0 0.0
        %1537 = vmatpush1.msra.mxu0 0.0
        %1538 = vmatprep.subr.mxu0 0.0
        %1539 = vmatpush1.msra.mxu0 0.0
        %1540 = vmatprep.subr.mxu0 0.0
        %1541 = vmatpush1.msra.mxu0 0.0
        %1542 = vmatprep.subr.mxu0 0.0
        %1543 = vmatpush1.msra.mxu0 0.0
        %1544 = vmatprep.subr.mxu0 0.0
        %1545 = vmatpush1.msra.mxu0 0.0
        %1546 = vmatprep.subr.mxu0 0.0
        %1547 = vmatpush1.msra.mxu0 0.0
        %1548 = vmatprep.subr.mxu0 0.0
        %1549 = vmatpush1.msra.mxu0 0.0
        %1550 = vmatprep.subr.mxu0 0.0
        %1551 = vmatpush1.msra.mxu0 0.0
        %1552 = vmatprep.subr.mxu0 0.0
        %1553 = vmatpush1.msra.mxu0 0.0
        %1554 = vmatprep.subr.mxu0 0.0
        %1555 = vmatpush1.msra.mxu0 0.0
        %1556 = vmatprep.subr.mxu0 0.0
        %1557 = vmatpush1.msra.mxu0 0.0
        %1558 = vmatprep.subr.mxu0 0.0
        %1559 = vmatpush1.msra.mxu0 0.0
        %1560 = vmatprep.subr.mxu0 0.0
        %1561 = vmatpush1.msra.mxu0 0.0
        %1562 = vmatprep.subr.mxu0 0.0
        %1563 = vmatpush1.msra.mxu0 0.0
        %1564 = vmatprep.subr.mxu0 0.0
        %1565 = vmatpush1.msra.mxu0 0.0
        %1566 = vmatprep.subr.mxu0 0.0
        %1567 = vmatpush1.msra.mxu0 0.0
        %1568 = vmatprep.subr.mxu0 0.0
        %1569 = vmatpush1.msra.mxu0 0.0
        %1570 = vmatprep.subr.mxu0 0.0
        %1571 = vmatpush1.msra.mxu0 0.0
        %1572 = vmatprep.subr.mxu0 0.0
        %1573 = vmatpush1.msra.mxu0 0.0
        %1574 = vmatprep.mubr.f32.mxu0 0.0
        %1575 = vmatmul.mubr.f32.gmra.mrb[0].mxu0 %v615
        %v1576 = vpop.f32.mrb[0].mxu0
        %v1577 = vadd.f32 0.0, %v1576
        %v1578 = vpop.f32.mrb[0].mxu0
        %1579 = vmatprep.mubr.f32.mxu0 0.0
        %1580 = vmatmul.mubr.f32.gmra.mrb[0].mxu0 %v618
        %v1581 = vpop.f32.mrb[0].mxu0
        %v1582 = vadd.f32 0.0, %v1581
        %v1583 = vpop.f32.mrb[0].mxu0
        %1584 = vmatprep.mubr.f32.mxu0 0.0
        %1585 = vmatmul.mubr.f32.gmra.mrb[0].mxu0 %v621
        %v1586 = vpop.f32.mrb[0].mxu0
        %v1587 = vadd.f32 0.0, %v1586
        %v1588 = vpop.f32.mrb[0].mxu0
        %1589 = vmatprep.mubr.f32.mxu0 0.0
        %1590 = vmatmul.mubr.f32.gmra.mrb[0].mxu0 %v624
        %v1591 = vpop.f32.mrb[0].mxu0
        %v1592 = vadd.f32 0.0, %v1591
        %v1593 = vpop.f32.mrb[0].mxu0
        %1594 = vdwg.mxu0
        %v1595 = vmax.f32 %v1417, %v1508
        %v1596 = vmax.f32 %v1418, %v1509
        %v1597 = vmax.f32 %v1419, %v1577
        %v1598 = vmax.f32 %v1420, %v1582
        %v1599 = vmax.f32 %v1421, %v1587
        %v1600 = vmax.f32 %v1422, %v1592
        %v1601 = vld [vmem:[%s234 + $0x18] sm:$0xf]
        %v1602 = vsub.f32 %v1601, %v346
        %v1603 = vpack.c.bf16 %v1602, %v1602
        %v1604 = vmul.f32 %v1601, %v1601
        %v1605 = vsel %vm352, %v1604, 0.0
        %v1606 = vrot.slane %v1605, 4
        %v1607 = vadd.f32 %v1605, %v1606
        %v1608 = vrot.slane %v1607, 2
        %v1609 = vadd.f32 %v1607, %v1608
        %v1610 = vrot.slane %v1609, 1
        %v1611 = vadd.f32 %v1609, %v1610
        %v1612 = vrsqrt.pop %v1611
        %v1613 = vmul.f32 %v1611, %v1612
        %vm1614 = vcmp.eq.f32.partialorder %v1611, inf
        %v1615 = vsel %vm1614, %v1611, %v1613
        %vm1616 = vcmp.eq.f32.partialorder %v1611, 0.0
        %v1617 = vand.u32 %v1611, 2147483648
        %v1618 = vsel %vm1616, %v1617, %v1615
        %v1619 = vlaneseq
        %v1620 = vshrl.u32 %v1619, 7
        %v1621 = vsub.s32 3, %v1620
        %v1622 = vrot.slane %v1601, %v1621
        %v1623 = vmul.f32 %v301, %v1622
        %v1624 = vmul.f32 %v305, %v1622
        %v1626 = vand.u32 %v1603, %v549
        %1628 = vmatprep.subr.bf16.mxu0 0
        %1629 = vmatpush1.bf16.msra.mxu0 %v1626
        %1630 = vmatprep.subr.bf16.mxu0 0
        %1631 = vmatpush1.bf16.msra.mxu0 0
        %1632 = vmatprep.subr.bf16.mxu0 0
        %1633 = vmatpush1.bf16.msra.mxu0 0
        %1634 = vmatprep.subr.bf16.mxu0 0
        %1635 = vmatpush1.bf16.msra.mxu0 0
        %1636 = vmatprep.subr.bf16.mxu0 0
        %1637 = vmatpush1.bf16.msra.mxu0 0
        %1638 = vmatprep.subr.bf16.mxu0 0
        %1639 = vmatpush1.bf16.msra.mxu0 0
        %1640 = vmatprep.subr.bf16.mxu0 0
        %1641 = vmatpush1.bf16.msra.mxu0 0
        %1642 = vmatprep.subr.bf16.mxu0 0
        %1643 = vmatpush1.bf16.msra.mxu0 0
        %1644 = vmatprep.subr.bf16.mxu0 0
        %1645 = vmatpush1.bf16.msra.mxu0 0
        %1646 = vmatprep.subr.bf16.mxu0 0
        %1647 = vmatpush1.bf16.msra.mxu0 0
        %1648 = vmatprep.subr.bf16.mxu0 0
        %1649 = vmatpush1.bf16.msra.mxu0 0
        %1650 = vmatprep.subr.bf16.mxu0 0
        %1651 = vmatpush1.bf16.msra.mxu0 0
        %1652 = vmatprep.subr.bf16.mxu0 0
        %1653 = vmatpush1.bf16.msra.mxu0 0
        %1654 = vmatprep.subr.bf16.mxu0 0
        %1655 = vmatpush1.bf16.msra.mxu0 0
        %1656 = vmatprep.subr.bf16.mxu0 0
        %1657 = vmatpush1.bf16.msra.mxu0 0
        %1658 = vmatprep.subr.bf16.mxu0 0
        %1659 = vmatpush1.bf16.msra.mxu0 0
        %1660 = vmatprep.mubr.bf16.mxu0 0
        %1661 = vmatmul.mubr.bf16.gmra.mrb[0].mxu0 %v544
        %v1662 = vpop.f32.mrb[0].mxu0
        %v1663 = vadd.f32 %v1623, %v1662
        %v1664 = vpop.f32.mrb[0].mxu0
        %v1665 = vpop.f32.mrb[0].mxu0
        %v1666 = vadd.f32 %v1624, %v1665
        %v1667 = vpop.f32.mrb[0].mxu0
        %1668 = vdwg.mxu0
        %v1669 = vmul.f32 %v309, %v1618
        %v1670 = vmul.f32 %v313, %v1618
        %v1671 = vadd.f32 %v1663, %v1669
        %v1672 = vadd.f32 %v1666, %v1670
        %vm1673 = vcmp.gt.f32.partialorder %v315, 6.0
        %v1674 = vsel %vm1673, 1, 0
        %v1675 = vcvt.s32.f32 %v1674
        %v1676 = vadd.f32 %v1671, %v516
        %v1677 = vadd.f32 %v1672, %v517
        %v1678 = vlaneseq
        %v1679 = vshrl.u32 %v1678, 7
        %v1680 = vsub.s32 0, %v1679
        %v1681 = vrot.slane %v1675, %v1680
        %v1682 = vmul.f32 %v1676, %v1681
        %v1683 = vmul.f32 %v1677, %v1681
        %v1684 = vadd.f32 %v1682, %v292
        %v1685 = vadd.f32 %v1683, %v297
        %v1686 = vmax.f32 %v1684, 0.0
        %v1687 = vmax.f32 %v1685, 0.0
        %1688 = vmatprep.subr.mxu0 0.0
        %1689 = vmatpush1.msra.mxu0 %v1686
        %1690 = vmatprep.subr.mxu0 0.0
        %1691 = vmatpush1.msra.mxu0 %v1687
        %1692 = vmatprep.subr.mxu0 0.0
        %1693 = vmatpush1.msra.mxu0 0.0
        %1694 = vmatprep.subr.mxu0 0.0
        %1695 = vmatpush1.msra.mxu0 0.0
        %1696 = vmatprep.subr.mxu0 0.0
        %1697 = vmatpush1.msra.mxu0 0.0
        %1698 = vmatprep.subr.mxu0 0.0
        %1699 = vmatpush1.msra.mxu0 0.0
        %1700 = vmatprep.subr.mxu0 0.0
        %1701 = vmatpush1.msra.mxu0 0.0
        %1702 = vmatprep.subr.mxu0 0.0
        %1703 = vmatpush1.msra.mxu0 0.0
        %1704 = vmatprep.subr.mxu0 0.0
        %1705 = vmatpush1.msra.mxu0 0.0
        %1706 = vmatprep.subr.mxu0 0.0
        %1707 = vmatpush1.msra.mxu0 0.0
        %1708 = vmatprep.subr.mxu0 0.0
        %1709 = vmatpush1.msra.mxu0 0.0
        %1710 = vmatprep.subr.mxu0 0.0
        %1711 = vmatpush1.msra.mxu0 0.0
        %1712 = vmatprep.subr.mxu0 0.0
        %1713 = vmatpush1.msra.mxu0 0.0
        %1714 = vmatprep.subr.mxu0 0.0
        %1715 = vmatpush1.msra.mxu0 0.0
        %1716 = vmatprep.subr.mxu0 0.0
        %1717 = vmatpush1.msra.mxu0 0.0
        %1718 = vmatprep.subr.mxu0 0.0
        %1719 = vmatpush1.msra.mxu0 0.0
        %1720 = vmatprep.subr.mxu0 0.0
        %1721 = vmatpush1.msra.mxu0 0.0
        %1722 = vmatprep.subr.mxu0 0.0
        %1723 = vmatpush1.msra.mxu0 0.0
        %1724 = vmatprep.subr.mxu0 0.0
        %1725 = vmatpush1.msra.mxu0 0.0
        %1726 = vmatprep.subr.mxu0 0.0
        %1727 = vmatpush1.msra.mxu0 0.0
        %1728 = vmatprep.subr.mxu0 0.0
        %1729 = vmatpush1.msra.mxu0 0.0
        %1730 = vmatprep.subr.mxu0 0.0
        %1731 = vmatpush1.msra.mxu0 0.0
        %1732 = vmatprep.subr.mxu0 0.0
        %1733 = vmatpush1.msra.mxu0 0.0
        %1734 = vmatprep.subr.mxu0 0.0
        %1735 = vmatpush1.msra.mxu0 0.0
        %1736 = vmatprep.subr.mxu0 0.0
        %1737 = vmatpush1.msra.mxu0 0.0
        %1738 = vmatprep.subr.mxu0 0.0
        %1739 = vmatpush1.msra.mxu0 0.0
        %1740 = vmatprep.subr.mxu0 0.0
        %1741 = vmatpush1.msra.mxu0 0.0
        %1742 = vmatprep.subr.mxu0 0.0
        %1743 = vmatpush1.msra.mxu0 0.0
        %1744 = vmatprep.subr.mxu0 0.0
        %1745 = vmatpush1.msra.mxu0 0.0
        %1746 = vmatprep.subr.mxu0 0.0
        %1747 = vmatpush1.msra.mxu0 0.0
        %1748 = vmatprep.subr.mxu0 0.0
        %1749 = vmatpush1.msra.mxu0 0.0
        %1750 = vmatprep.subr.mxu0 0.0
        %1751 = vmatpush1.msra.mxu0 0.0
        %1752 = vmatprep.mubr.f32.mxu0 0.0
        %1753 = vmatmul.mubr.f32.gmra.mrb[0].mxu0 %v615
        %v1754 = vpop.f32.mrb[0].mxu0
        %v1755 = vadd.f32 0.0, %v1754
        %v1756 = vpop.f32.mrb[0].mxu0
        %1757 = vmatprep.mubr.f32.mxu0 0.0
        %1758 = vmatmul.mubr.f32.gmra.mrb[0].mxu0 %v618
        %v1759 = vpop.f32.mrb[0].mxu0
        %v1760 = vadd.f32 0.0, %v1759
        %v1761 = vpop.f32.mrb[0].mxu0
        %1762 = vmatprep.mubr.f32.mxu0 0.0
        %1763 = vmatmul.mubr.f32.gmra.mrb[0].mxu0 %v621
        %v1764 = vpop.f32.mrb[0].mxu0
        %v1765 = vadd.f32 0.0, %v1764
        %v1766 = vpop.f32.mrb[0].mxu0
        %1767 = vmatprep.mubr.f32.mxu0 0.0
        %1768 = vmatmul.mubr.f32.gmra.mrb[0].mxu0 %v624
        %v1769 = vpop.f32.mrb[0].mxu0
        %v1770 = vadd.f32 0.0, %v1769
        %v1771 = vpop.f32.mrb[0].mxu0
        %1772 = vdwg.mxu0
        %v1773 = vmax.f32 %v1595, %v1686
        %v1774 = vmax.f32 %v1596, %v1687
        %v1775 = vmax.f32 %v1597, %v1755
        %v1776 = vmax.f32 %v1598, %v1760
        %v1777 = vmax.f32 %v1599, %v1765
        %v1778 = vmax.f32 %v1600, %v1770
        %v1779 = vld [vmem:[%s234 + $0x1c] sm:$0xf]
        %v1780 = vsub.f32 %v1779, %v346
        %v1781 = vpack.c.bf16 %v1780, %v1780
        %v1782 = vmul.f32 %v1779, %v1779
        %v1783 = vsel %vm352, %v1782, 0.0
        %v1784 = vrot.slane %v1783, 4
        %v1785 = vadd.f32 %v1783, %v1784
        %v1786 = vrot.slane %v1785, 2
        %v1787 = vadd.f32 %v1785, %v1786
        %v1788 = vrot.slane %v1787, 1
        %v1789 = vadd.f32 %v1787, %v1788
        %v1790 = vrsqrt.pop %v1789
        %v1791 = vmul.f32 %v1789, %v1790
        %vm1792 = vcmp.eq.f32.partialorder %v1789, inf
        %v1793 = vsel %vm1792, %v1789, %v1791
        %vm1794 = vcmp.eq.f32.partialorder %v1789, 0.0
        %v1795 = vand.u32 %v1789, 2147483648
        %v1796 = vsel %vm1794, %v1795, %v1793
        %v1797 = vlaneseq
        %v1798 = vshrl.u32 %v1797, 7
        %v1799 = vsub.s32 3, %v1798
        %v1800 = vrot.slane %v1779, %v1799
        %v1801 = vmul.f32 %v301, %v1800
        %v1802 = vmul.f32 %v305, %v1800
        %v1804 = vand.u32 %v1781, %v549
        %1806 = vmatprep.subr.bf16.mxu0 0
        %1807 = vmatpush1.bf16.msra.mxu0 %v1804
        %1808 = vmatprep.subr.bf16.mxu0 0
        %1809 = vmatpush1.bf16.msra.mxu0 0
        %1810 = vmatprep.subr.bf16.mxu0 0
        %1811 = vmatpush1.bf16.msra.mxu0 0
        %1812 = vmatprep.subr.bf16.mxu0 0
        %1813 = vmatpush1.bf16.msra.mxu0 0
        %1814 = vmatprep.subr.bf16.mxu0 0
        %1815 = vmatpush1.bf16.msra.mxu0 0
        %1816 = vmatprep.subr.bf16.mxu0 0
        %1817 = vmatpush1.bf16.msra.mxu0 0
        %1818 = vmatprep.subr.bf16.mxu0 0
        %1819 = vmatpush1.bf16.msra.mxu0 0
        %1820 = vmatprep.subr.bf16.mxu0 0
        %1821 = vmatpush1.bf16.msra.mxu0 0
        %1822 = vmatprep.subr.bf16.mxu0 0
        %1823 = vmatpush1.bf16.msra.mxu0 0
        %1824 = vmatprep.subr.bf16.mxu0 0
        %1825 = vmatpush1.bf16.msra.mxu0 0
        %1826 = vmatprep.subr.bf16.mxu0 0
        %1827 = vmatpush1.bf16.msra.mxu0 0
        %1828 = vmatprep.subr.bf16.mxu0 0
        %1829 = vmatpush1.bf16.msra.mxu0 0
        %1830 = vmatprep.subr.bf16.mxu0 0
        %1831 = vmatpush1.bf16.msra.mxu0 0
        %1832 = vmatprep.subr.bf16.mxu0 0
        %1833 = vmatpush1.bf16.msra.mxu0 0
        %1834 = vmatprep.subr.bf16.mxu0 0
        %1835 = vmatpush1.bf16.msra.mxu0 0
        %1836 = vmatprep.subr.bf16.mxu0 0
        %1837 = vmatpush1.bf16.msra.mxu0 0
        %1838 = vmatprep.mubr.bf16.mxu0 0
        %1839 = vmatmul.mubr.bf16.gmra.mrb[0].mxu0 %v544
        %v1840 = vpop.f32.mrb[0].mxu0
        %v1841 = vadd.f32 %v1801, %v1840
        %v1842 = vpop.f32.mrb[0].mxu0
        %v1843 = vpop.f32.mrb[0].mxu0
        %v1844 = vadd.f32 %v1802, %v1843
        %v1845 = vpop.f32.mrb[0].mxu0
        %1846 = vdwg.mxu0
        %v1847 = vmul.f32 %v309, %v1796
        %v1848 = vmul.f32 %v313, %v1796
        %v1849 = vadd.f32 %v1841, %v1847
        %v1850 = vadd.f32 %v1844, %v1848
        %vm1851 = vcmp.gt.f32.partialorder %v315, 7.0
        %v1852 = vsel %vm1851, 1, 0
        %v1853 = vcvt.s32.f32 %v1852
        %v1854 = vadd.f32 %v1849, %v516
        %v1855 = vadd.f32 %v1850, %v517
        %v1856 = vlaneseq
        %v1857 = vshrl.u32 %v1856, 7
        %v1858 = vsub.s32 0, %v1857
        %v1859 = vrot.slane %v1853, %v1858
        %v1860 = vmul.f32 %v1854, %v1859
        %v1861 = vmul.f32 %v1855, %v1859
        %v1862 = vadd.f32 %v1860, %v292
        %v1863 = vadd.f32 %v1861, %v297
        %v1864 = vmax.f32 %v1862, 0.0
        %v1865 = vmax.f32 %v1863, 0.0
        %1866 = vmatprep.subr.mxu0 0.0
        %1867 = vmatpush1.msra.mxu0 %v1864
        %1868 = vmatprep.subr.mxu0 0.0
        %1869 = vmatpush1.msra.mxu0 %v1865
        %1870 = vmatprep.subr.mxu0 0.0
        %1871 = vmatpush1.msra.mxu0 0.0
        %1872 = vmatprep.subr.mxu0 0.0
        %1873 = vmatpush1.msra.mxu0 0.0
        %1874 = vmatprep.subr.mxu0 0.0
        %1875 = vmatpush1.msra.mxu0 0.0
        %1876 = vmatprep.subr.mxu0 0.0
        %1877 = vmatpush1.msra.mxu0 0.0
        %1878 = vmatprep.subr.mxu0 0.0
        %1879 = vmatpush1.msra.mxu0 0.0
        %1880 = vmatprep.subr.mxu0 0.0
        %1881 = vmatpush1.msra.mxu0 0.0
        %1882 = vmatprep.subr.mxu0 0.0
        %1883 = vmatpush1.msra.mxu0 0.0
        %1884 = vmatprep.subr.mxu0 0.0
        %1885 = vmatpush1.msra.mxu0 0.0
        %1886 = vmatprep.subr.mxu0 0.0
        %1887 = vmatpush1.msra.mxu0 0.0
        %1888 = vmatprep.subr.mxu0 0.0
        %1889 = vmatpush1.msra.mxu0 0.0
        %1890 = vmatprep.subr.mxu0 0.0
        %1891 = vmatpush1.msra.mxu0 0.0
        %1892 = vmatprep.subr.mxu0 0.0
        %1893 = vmatpush1.msra.mxu0 0.0
        %1894 = vmatprep.subr.mxu0 0.0
        %1895 = vmatpush1.msra.mxu0 0.0
        %1896 = vmatprep.subr.mxu0 0.0
        %1897 = vmatpush1.msra.mxu0 0.0
        %1898 = vmatprep.subr.mxu0 0.0
        %1899 = vmatpush1.msra.mxu0 0.0
        %1900 = vmatprep.subr.mxu0 0.0
        %1901 = vmatpush1.msra.mxu0 0.0
        %1902 = vmatprep.subr.mxu0 0.0
        %1903 = vmatpush1.msra.mxu0 0.0
        %1904 = vmatprep.subr.mxu0 0.0
        %1905 = vmatpush1.msra.mxu0 0.0
        %1906 = vmatprep.subr.mxu0 0.0
        %1907 = vmatpush1.msra.mxu0 0.0
        %1908 = vmatprep.subr.mxu0 0.0
        %1909 = vmatpush1.msra.mxu0 0.0
        %1910 = vmatprep.subr.mxu0 0.0
        %1911 = vmatpush1.msra.mxu0 0.0
        %1912 = vmatprep.subr.mxu0 0.0
        %1913 = vmatpush1.msra.mxu0 0.0
        %1914 = vmatprep.subr.mxu0 0.0
        %1915 = vmatpush1.msra.mxu0 0.0
        %1916 = vmatprep.subr.mxu0 0.0
        %1917 = vmatpush1.msra.mxu0 0.0
        %1918 = vmatprep.subr.mxu0 0.0
        %1919 = vmatpush1.msra.mxu0 0.0
        %1920 = vmatprep.subr.mxu0 0.0
        %1921 = vmatpush1.msra.mxu0 0.0
        %1922 = vmatprep.subr.mxu0 0.0
        %1923 = vmatpush1.msra.mxu0 0.0
        %1924 = vmatprep.subr.mxu0 0.0
        %1925 = vmatpush1.msra.mxu0 0.0
        %1926 = vmatprep.subr.mxu0 0.0
        %1927 = vmatpush1.msra.mxu0 0.0
        %1928 = vmatprep.subr.mxu0 0.0
        %1929 = vmatpush1.msra.mxu0 0.0
        %1930 = vmatprep.mubr.f32.mxu0 0.0
        %1931 = vmatmul.mubr.f32.gmra.mrb[0].mxu0 %v615
        %v1932 = vpop.f32.mrb[0].mxu0
        %v1933 = vadd.f32 0.0, %v1932
        %v1934 = vpop.f32.mrb[0].mxu0
        %1935 = vmatprep.mubr.f32.mxu0 0.0
        %1936 = vmatmul.mubr.f32.gmra.mrb[0].mxu0 %v618
        %v1937 = vpop.f32.mrb[0].mxu0
        %v1938 = vadd.f32 0.0, %v1937
        %v1939 = vpop.f32.mrb[0].mxu0
        %1940 = vmatprep.mubr.f32.mxu0 0.0
        %1941 = vmatmul.mubr.f32.gmra.mrb[0].mxu0 %v621
        %v1942 = vpop.f32.mrb[0].mxu0
        %v1943 = vadd.f32 0.0, %v1942
        %v1944 = vpop.f32.mrb[0].mxu0
        %1945 = vmatprep.mubr.f32.mxu0 0.0
        %1946 = vmatmul.mubr.f32.gmra.mrb[0].mxu0 %v624
        %v1947 = vpop.f32.mrb[0].mxu0
        %v1948 = vadd.f32 0.0, %v1947
        %v1949 = vpop.f32.mrb[0].mxu0
        %1950 = vdwg.mxu0
        %v1951 = vmax.f32 %v1773, %v1864
        %v1952 = vmax.f32 %v1774, %v1865
        %v1953 = vmax.f32 %v1775, %v1933
        %v1954 = vmax.f32 %v1776, %v1938
        %v1955 = vmax.f32 %v1777, %v1943
        %v1956 = vmax.f32 %v1778, %v1948
        %1957 = vrot.lane.b32.xlu0 %v284, 112
        %v1958 = vpop.permute.xlu0 %1957
        %1959 = vrot.lane.b32.xlu0 %v285, 112
        %v1960 = vpop.permute.xlu0 %1959
        %1961 = vrot.lane.b32.xlu0 %v286, 112
        %v1962 = vpop.permute.xlu0 %1961
        %1963 = vrot.lane.b32.xlu0 %v287, 112
        %v1964 = vpop.permute.xlu0 %1963
        %v1965 = vsel %vm613, %v1958, 0
        %v1967 = vsel %vm613, %v1960, 0
        %v1969 = vsel %vm613, %v1962, 0
        %v1971 = vsel %vm613, %v1964, 0
        %1973 = vmatprep.subr.mxu0 0.0
        %1974 = vmatpush1.msra.mxu0 %v1951
        %1975 = vmatprep.subr.mxu0 0.0
        %1976 = vmatpush1.msra.mxu0 %v1952
        %1977 = vmatprep.subr.mxu0 0.0
        %1978 = vmatpush1.msra.mxu0 0.0
        %1979 = vmatprep.subr.mxu0 0.0
        %1980 = vmatpush1.msra.mxu0 0.0
        %1981 = vmatprep.subr.mxu0 0.0
        %1982 = vmatpush1.msra.mxu0 0.0
        %1983 = vmatprep.subr.mxu0 0.0
        %1984 = vmatpush1.msra.mxu0 0.0
        %1985 = vmatprep.subr.mxu0 0.0
        %1986 = vmatpush1.msra.mxu0 0.0
        %1987 = vmatprep.subr.mxu0 0.0
        %1988 = vmatpush1.msra.mxu0 0.0
        %1989 = vmatprep.subr.mxu0 0.0
        %1990 = vmatpush1.msra.mxu0 0.0
        %1991 = vmatprep.subr.mxu0 0.0
        %1992 = vmatpush1.msra.mxu0 0.0
        %1993 = vmatprep.subr.mxu0 0.0
        %1994 = vmatpush1.msra.mxu0 0.0
        %1995 = vmatprep.subr.mxu0 0.0
        %1996 = vmatpush1.msra.mxu0 0.0
        %1997 = vmatprep.subr.mxu0 0.0
        %1998 = vmatpush1.msra.mxu0 0.0
        %1999 = vmatprep.subr.mxu0 0.0
        %2000 = vmatpush1.msra.mxu0 0.0
        %2001 = vmatprep.subr.mxu0 0.0
        %2002 = vmatpush1.msra.mxu0 0.0
        %2003 = vmatprep.subr.mxu0 0.0
        %2004 = vmatpush1.msra.mxu0 0.0
        %2005 = vmatprep.subr.mxu0 0.0
        %2006 = vmatpush1.msra.mxu0 0.0
        %2007 = vmatprep.subr.mxu0 0.0
        %2008 = vmatpush1.msra.mxu0 0.0
        %2009 = vmatprep.subr.mxu0 0.0
        %2010 = vmatpush1.msra.mxu0 0.0
        %2011 = vmatprep.subr.mxu0 0.0
        %2012 = vmatpush1.msra.mxu0 0.0
        %2013 = vmatprep.subr.mxu0 0.0
        %2014 = vmatpush1.msra.mxu0 0.0
        %2015 = vmatprep.subr.mxu0 0.0
        %2016 = vmatpush1.msra.mxu0 0.0
        %2017 = vmatprep.subr.mxu0 0.0
        %2018 = vmatpush1.msra.mxu0 0.0
        %2019 = vmatprep.subr.mxu0 0.0
        %2020 = vmatpush1.msra.mxu0 0.0
        %2021 = vmatprep.subr.mxu0 0.0
        %2022 = vmatpush1.msra.mxu0 0.0
        %2023 = vmatprep.subr.mxu0 0.0
        %2024 = vmatpush1.msra.mxu0 0.0
        %2025 = vmatprep.subr.mxu0 0.0
        %2026 = vmatpush1.msra.mxu0 0.0
        %2027 = vmatprep.subr.mxu0 0.0
        %2028 = vmatpush1.msra.mxu0 0.0
        %2029 = vmatprep.subr.mxu0 0.0
        %2030 = vmatpush1.msra.mxu0 0.0
        %2031 = vmatprep.subr.mxu0 0.0
        %2032 = vmatpush1.msra.mxu0 0.0
        %2033 = vmatprep.subr.mxu0 0.0
        %2034 = vmatpush1.msra.mxu0 0.0
        %2035 = vmatprep.subr.mxu0 0.0
        %2036 = vmatpush1.msra.mxu0 0.0
        %2037 = vmatprep.mubr.f32.mxu0 0.0
        %2038 = vmatmul.mubr.f32.gmra.mrb[0].mxu0 %v1965
        %v2039 = vpop.f32.mrb[0].mxu0
        %v2040 = vadd.f32 0.0, %v2039
        %v2041 = vpop.f32.mrb[0].mxu0
        %2042 = vmatprep.mubr.f32.mxu0 0.0
        %2043 = vmatmul.mubr.f32.gmra.mrb[0].mxu0 %v1967
        %v2044 = vpop.f32.mrb[0].mxu0
        %v2045 = vadd.f32 0.0, %v2044
        %v2046 = vpop.f32.mrb[0].mxu0
        %2047 = vmatprep.mubr.f32.mxu0 0.0
        %2048 = vmatmul.mubr.f32.gmra.mrb[0].mxu0 %v1969
        %v2049 = vpop.f32.mrb[0].mxu0
        %v2050 = vadd.f32 0.0, %v2049
        %v2051 = vpop.f32.mrb[0].mxu0
        %2052 = vmatprep.mubr.f32.mxu0 0.0
        %2053 = vmatmul.mubr.f32.gmra.mrb[0].mxu0 %v1971
        %v2054 = vpop.f32.mrb[0].mxu0
        %v2055 = vadd.f32 0.0, %v2054
        %v2056 = vpop.f32.mrb[0].mxu0
        %2057 = vdwg.mxu0
        %v2058 = vadd.f32 %v1953, %v2040
        %v2059 = vadd.f32 %v1954, %v2045
        %v2060 = vadd.f32 %v1955, %v2050
        %v2061 = vadd.f32 %v1956, %v2055
        %2062 = vset.pattern.permute.xlu0 32
        %2063 = vperm.xlu0 %2062, %v284
        %v2064 = vpop.permute.xlu0 %2063
        %2066 = vset.pattern.permute.xlu0 32
        %2067 = vperm.xlu0 %2066, %v285
        %v2068 = vpop.permute.xlu0 %2067
        %2070 = vset.pattern.permute.xlu0 32
        %2071 = vperm.xlu0 %2070, %v286
        %v2072 = vpop.permute.xlu0 %2071
        %2074 = vset.pattern.permute.xlu0 32
        %2075 = vperm.xlu0 %2074, %v287
        %v2076 = vpop.permute.xlu0 %2075
        %v2078 = vadd.f32 %v2058, %v2064
        %v2079 = vadd.f32 %v2059, %v2068
        %v2080 = vadd.f32 %v2060, %v2072
        %v2081 = vadd.f32 %v2061, %v2076
        %v2082 = vmax.f32 %v2078, 0.0
        %v2083 = vmax.f32 %v2079, 0.0
        %v2084 = vmax.f32 %v2080, 0.0
        %v2085 = vmax.f32 %v2081, 0.0
        %2086 = vst [vmem:[%s280] sm:$0xff] %v2082
        %2087 = vst [vmem:[%s280 + $0x8] sm:$0xff] %v2083
        %2088 = vst [vmem:[%s280 + $0x10] sm:$0xff] %v2084
        %2089 = vst [vmem:[%s280 + $0x18] sm:$0xff] %v2085
        %s2090 = sand.u32 %s127, 1
        %s2091 = scalar_lea.sflag [#allocation4], %s2090
        %s2092 = sand.u32 %s127, 1
        %s2093 = smul.addr %s2092, 32
        %s2094 = scalar_lea.vmem [#allocation10], %s2093
        // Predicated region
        $region53: #{tpu_custom_call.1} parent=35 // pred_check
          %p2095 = pneg %p137
        $region54: #{tpu_custom_call.1} parent=35 // pred_check_branch
          %2097 = sbr.rel (%p2095) target = $region56
        $region55: #{tpu_custom_call.1} parent=35 // pred_region
          %s2099 = ssub.s32 512, 512
          %2100 = vsyncadd %s2091, %s2099
          %s2101 = smul.addr %s25, 128
          %s2102 = scalar_lea.hbm %s4, %s2101
          %s2103 = sshll.u32 %s2094, 4
          %s2104 = int_to_ptr.vmem [resolvable:$true] %s2103
          %2109 = dma.vmem_to_hbm [thread:$0]  %s2104, 512, %s2102, %s2091, 128, 1024, 8
        $region56: #{tpu_custom_call.1} parent=35 // pred_fallthru
          _
      $region36: #{tpu_custom_call.1} parent=5 // pred_fallthru
        _
      %p2110 = scmp.le.s32.totalorder 2, %s20
      // Predicated region
      $region57: #{tpu_custom_call.1} parent=5 // pred_check
        %p2111 = pneg %p2110
      $region58: #{tpu_custom_call.1} parent=5 // pred_check_branch
        %2113 = sbr.rel (%p2111) target = $region60
      $region59: #{tpu_custom_call.1} parent=5 // pred_region
        %s2114 = ssub.s32 %s20, 2
        // Predicated region
        $region61: #{tpu_custom_call.1} parent=59 // pred_check
          %p2115 = pneg %p143
        $region62: #{tpu_custom_call.1} parent=59 // pred_check_branch
          %2117 = sbr.rel (%p2115) target = $region64
        $region63: #{tpu_custom_call.1} parent=59 // pred_region
          %s2118 = sand.u32 %s128, 1
          %s2119 = scalar_lea.sflag [#allocation4], %s2118
          %s2120 = sand.u32 %s128, 1
          %s2121 = smul.addr %s2120, 32
          %s2122 = scalar_lea.vmem [#allocation10], %s2121
          %2123 = dma.done %s2119, 512
        $region64: #{tpu_custom_call.1} parent=59 // pred_fallthru
          _
      $region60: #{tpu_custom_call.1} parent=5 // pred_fallthru
        _
    $region6: #{tpu_custom_call.1} parent=1 // loop_footer
      %s24 = sadd.s32 1, %s20
    $region7: #{tpu_custom_call.1} parent=1 // loop_footer_branch
      %19 = sbr.rel target = $region3
    $region8: #{tpu_custom_call.1} parent=1 // loop_exit
      _
    %2124 = vsyncpa [#allocation3], 1
    %s2125 = scalar_lea.sflag [#allocation3], 1
    %2126 = vsyncpa %s2125, 1
    %2127 = vsyncpa [#allocation6], 1
    %s2128 = scalar_lea.sflag [#allocation6], 1
    %2129 = vsyncpa %s2128, 1
    %2130 = vsyncpa [#allocation9], 1
    %2131 = vsyncpa [#allocation4], 1
    %s2132 = scalar_lea.sflag [#allocation4], 1
    %2133 = vsyncpa %s2132, 1

</llo_original>
